<compile_context>
chip_gen: v6e
topology: v6e:2x2x1
jax: 0.10.0
libtpu: 0.0.40
codegen_flags: <defaults>
</compile_context>

<pallas_src>
import functools
from typing import NamedTuple

import numpy as np

import jax
import jax.numpy as jnp
from jax.experimental import pallas as pl
from jax.experimental.pallas import tpu as pltpu


# ----------------------------------------------------------------------------
# Helpers
# ----------------------------------------------------------------------------
def _round_up(x, m):
    return ((x + m - 1) // m) * m


def _auto_vmem_limit():
    """Per-generation VMEM budget: ~112 MiB on v5e/v6e (128 MiB physical),
    ~56 MiB on v7x (64 MiB physical)."""
    cap = 64 * 1024 * 1024
    try:
        info = pltpu.get_tpu_info()
        cap = int(getattr(info, "vmem_capacity_bytes", cap) or cap)
    except Exception:
        pass
    cap = max(cap, 64 * 1024 * 1024)
    return int(min(cap - 8 * 1024 * 1024, 112 * 1024 * 1024))


def _auto_tm(M, sublane):
    """Row tile: as large as possible up to 512 (sublane aligned); split into
    >=2 row tiles (v7x megacore) when that still leaves tm >= 256."""
    tm = min(512, _round_up(M, sublane))
    half = _round_up(-(-M // 2), sublane)
    if 256 <= half < tm:
        tm = half
    return tm


def _auto_th(dim, hidden, tm, itemsize, out_itemsize, use_acc, vmem_limit,
             weight_buffers):
    """Largest hidden tile (multiple of 128, preferring multiples of 256 so the
    256-wide MXU on v6e/v7x is filled) that keeps the weight pipeline inside
    the VMEM budget."""
    budget = vmem_limit - 2 * 1024 * 1024           # slack for compiler scratch
    fixed = 2 * tm * dim * itemsize + 2 * tm * dim * out_itemsize
    if use_acc:
        fixed += tm * dim * 4
    # fused w13 contributes 2*dim elems per hidden column, w2 contributes dim.
    per_th = weight_buffers * 3 * dim * itemsize
    avail = max(budget - fixed, 0)
    th_max = max(128, (avail // per_th) // 128 * 128)
    th_cap = _round_up(hidden, 128)
    th = min(1024, th_max, th_cap)
    if th < th_cap and th >= 256:
        th = (th // 256) * 256
    return int(max(th, 128))


def _weight_spec(shape, index_map, buffers):
    if buffers == 2:
        return pl.BlockSpec(shape, index_map)
    return pl.BlockSpec(shape, index_map, pipeline_mode=pl.Buffered(buffers))


# ----------------------------------------------------------------------------
# Kernel
# ----------------------------------------------------------------------------
def _ffn_kernel(x_ref, w13_ref, w2_ref, o_ref, *scratch, th, approx_sig, use_acc):
    # x_ref   : (tm, dim)    row tile (constant across hidden axis -> no re-DMA)
    # w13_ref : (dim, 2*th)  fused [w1_j | w3_j] hidden slice
    # w2_ref  : (th, dim)    hidden slice of w2
    # o_ref   : (tm, dim)    output tile (resident across hidden axis)
    # scratch : optional (tm, dim) f32 accumulator (only when out dtype != f32)
    acc_ref = scratch[0] if use_acc else o_ref
    j = pl.program_id(1)

    x = x_ref[...]
    h13 = jnp.dot(x, w13_ref[...], preferred_element_type=jnp.float32)
    h1 = h13[:, :th]
    h3 = h13[:, th:]
    if approx_sig:
        # sigmoid via EUP exp + approx reciprocal: keeps the VALU free.
        sig = pl.reciprocal(1.0 + jnp.exp(-h1), approx=True)
    else:
        sig = jax.nn.sigmoid(h1)
    h = (h1 * sig) * h3
    contrib = jnp.dot(h.astype(w2_ref.dtype), w2_ref[...],
                      preferred_element_type=jnp.float32)

    @pl.when(j == 0)
    def _():
        acc_ref[...] = contrib        # direct write: no zero-fill + read-add

    @pl.when(j > 0)
    def _():
        acc_ref[...] += contrib

    if use_acc:
        @pl.when(j == pl.num_programs(1) - 1)
        def _():
            o_ref[...] = acc_ref[...].astype(o_ref.dtype)


# ----------------------------------------------------------------------------
# Weight preparation (do this ONCE at parameter-load time)
# ----------------------------------------------------------------------------
class PreparedFFNWeights(NamedTuple):
    w13: jax.Array      # (dim, 2*hidden_pad) per-tile interleaved [w1_j | w3_j]
    w2: jax.Array       # (hidden_pad, dim), zero-padded rows
    dim: int
    hidden: int
    hidden_pad: int
    th: int


def prepare_ffn_weights(w1, w3, w2, *, th, compute_dtype):
    """Cast, pad (hidden -> multiple of th) and interleave the weights once.
    Padded columns/rows are zero so they contribute nothing."""
    dim, hidden = w1.shape
    assert w3.shape == (dim, hidden) and w2.shape == (hidden, dim)
    assert dim % 128 == 0, "dim must be a multiple of 128 (lane-dense tiles)"
    assert th % 128 == 0
    hidden_pad = _round_up(hidden, th)
    pad = hidden_pad - hidden
    w1c = w1.astype(compute_dtype)
    w3c = w3.astype(compute_dtype)
    w2c = w2.astype(compute_dtype)
    if pad:
        w1c = jnp.pad(w1c, ((0, 0), (0, pad)))
        w3c = jnp.pad(w3c, ((0, 0), (0, pad)))
        w2c = jnp.pad(w2c, ((0, pad), (0, 0)))
    nj = hidden_pad // th
    w13 = jnp.concatenate(
        [w1c.reshape(dim, nj, th), w3c.reshape(dim, nj, th)], axis=2
    ).reshape(dim, 2 * hidden_pad)
    return PreparedFFNWeights(w13, w2c, dim, hidden, hidden_pad, th)


# ----------------------------------------------------------------------------
# Wrappers
# ----------------------------------------------------------------------------
def feed_forward_pallas_prepared(x, prep, *, tm=None, vmem_limit_bytes=None,
                                 weight_buffers=2):
    """x: [B, S, dim]; prep: PreparedFFNWeights (cast/padded/interleaved)."""
    B, S, dim = x.shape
    assert dim == prep.dim
    compute_dtype = prep.w13.dtype
    out_dtype = x.dtype
    itemsize = np.dtype(compute_dtype).itemsize
    out_itemsize = np.dtype(out_dtype).itemsize
    sublane = max(8, 32 // itemsize)
    use_acc = np.dtype(out_dtype) != np.dtype(jnp.float32)
    approx_sig = np.dtype(compute_dtype) == np.dtype(jnp.bfloat16)

    M = B * S
    if vmem_limit_bytes is None:
        vmem_limit_bytes = _auto_vmem_limit()
    if tm is None:
        tm = _auto_tm(M, sublane)
    assert tm % sublane == 0
    M_pad = _round_up(M, tm)

    th = prep.th
    hidden_pad = prep.hidden_pad
    grid = (M_pad // tm, hidden_pad // th)

    x2d = x.reshape(M, dim)
    if x2d.dtype != compute_dtype:
        x2d = x2d.astype(compute_dtype)
    if M_pad != M:
        x2d = jnp.pad(x2d, ((0, M_pad - M), (0, 0)))

    flops = 6 * M_pad * dim * hidden_pad
    bytes_accessed = (M_pad * dim * itemsize
                      + grid[0] * 3 * dim * hidden_pad * itemsize
                      + M_pad * dim * out_itemsize)
    cost = pl.CostEstimate(flops=int(flops),
                           transcendentals=int(M_pad * hidden_pad),
                           bytes_accessed=int(bytes_accessed))

    kernel = functools.partial(_ffn_kernel, th=th, approx_sig=approx_sig,
                               use_acc=use_acc)

    out2d = pl.pallas_call(
        kernel,
        out_shape=jax.ShapeDtypeStruct((M_pad, dim), out_dtype),
        grid_spec=pltpu.PrefetchScalarGridSpec(
            num_scalar_prefetch=0,
            grid=grid,
            in_specs=[
                pl.BlockSpec((tm, dim), lambda i, j: (i, 0)),            # x rows
                _weight_spec((dim, 2 * th), lambda i, j: (0, j),
                             weight_buffers),                            # w1||w3
                _weight_spec((th, dim), lambda i, j: (j, 0),
                             weight_buffers),                            # w2
            ],
            out_specs=pl.BlockSpec((tm, dim), lambda i, j: (i, 0)),
            scratch_shapes=([pltpu.VMEM((tm, dim), jnp.float32)]
                            if use_acc else []),
        ),
        compiler_params=pltpu.CompilerParams(
            dimension_semantics=("parallel", "arbitrary"),
            vmem_limit_bytes=int(vmem_limit_bytes),
        ),
        cost_estimate=cost,
    )(x2d, prep.w13, prep.w2)

    if M_pad != M:
        out2d = out2d[:M]
    return out2d.reshape(B, S, dim)


def feed_forward_pallas(x, w1, w3, w2, *, tm=None, th=None, compute_dtype=None,
                        vmem_limit_bytes=None, weight_buffers=2):
    """Convenience wrapper.  For repeated calls, call prepare_ffn_weights once
    and use feed_forward_pallas_prepared so the weight cast/pad/interleave does
    not re-materialize 3*dim*hidden elements in HBM per invocation."""
    B, S, dim = x.shape
    dim_w1, hidden = w1.shape
    assert dim_w1 == dim
    assert w3.shape == (dim, hidden) and w2.shape == (hidden, dim)
    assert dim % 128 == 0

    if compute_dtype is None:
        compute_dtype = x.dtype
    itemsize = np.dtype(compute_dtype).itemsize
    out_itemsize = np.dtype(x.dtype).itemsize
    sublane = max(8, 32 // itemsize)
    use_acc = np.dtype(x.dtype) != np.dtype(jnp.float32)

    M = B * S
    if vmem_limit_bytes is None:
        vmem_limit_bytes = _auto_vmem_limit()
    if tm is None:
        tm = _auto_tm(M, sublane)
    if th is None:
        th = _auto_th(dim, hidden, tm, itemsize, out_itemsize, use_acc,
                      vmem_limit_bytes, weight_buffers)
    assert th % 128 == 0

    prep = prepare_ffn_weights(w1, w3, w2, th=th, compute_dtype=compute_dtype)
    return feed_forward_pallas_prepared(x, prep, tm=tm,
                                        vmem_limit_bytes=vmem_limit_bytes,
                                        weight_buffers=weight_buffers)


def _round_hidden(dim, hidden_dim, multiple_of, ffn_dim_multiplier):
    # Exactly mirrors the PyTorch FeedForward.__init__ arithmetic.
    hidden_dim = int(2 * hidden_dim / 3)
    if ffn_dim_multiplier is not None:
        hidden_dim = int(ffn_dim_multiplier * hidden_dim)
    hidden_dim = multiple_of * ((hidden_dim + multiple_of - 1) // multiple_of)
    return hidden_dim


# TODO(synk): only the SwiGLU FeedForward block of StreamVoice is kernelized
# here; embedding lookup, RoPE attention, RMSNorm and the top-k multinomial
# sampling loop remain plain-JAX/PyTorch concerns.

if __name__ == "__main__":
    # Small but lane/sublane-aligned shapes consistent with the module:
    # transformer_dim=128, hidden_dim arg = 4*dim = 512, multiple_of=128 -> 384.
    batch, seq, dim = 2, 64, 128
    hidden = _round_hidden(dim, 4 * dim, multiple_of=128, ffn_dim_multiplier=None)  # 384

    key = jax.random.PRNGKey(0)
    kx, k1, k2, k3 = jax.random.split(key, 4)

    x = jax.random.normal(kx, (batch, seq, dim), dtype=jnp.float32)
    # Deterministic init, stored as [in, out] (transpose of PyTorch Linear).
    w1 = jax.random.normal(k1, (dim, hidden), dtype=jnp.float32) * 0.02
    w3 = jax.random.normal(k3, (dim, hidden), dtype=jnp.float32) * 0.02
    w2 = jax.random.normal(k2, (hidden, dim), dtype=jnp.float32) * 0.02

    # Pure-JAX reference (same math as the PyTorch forward).
    h1 = x @ w1
    ref = (jax.nn.silu(h1) * (x @ w3)) @ w2

    # 1) Default tiling (auto tm/th), f32 compute, f32 output (direct o_ref acc).
    out = feed_forward_pallas(x, w1, w3, w2)
    jax.block_until_ready(out)
    assert out.shape == (batch, seq, dim)
    assert jnp.allclose(out, ref, atol=1e-5, rtol=1e-5)

    # 2) Small explicit tiles to exercise both grid axes, the padded-hidden
    #    path and the multi-step accumulation (grid = (2, 3)).
    out_tiled = feed_forward_pallas(x, w1, w3, w2, tm=64, th=128)
    jax.block_until_ready(out_tiled)
    assert jnp.allclose(out_tiled, ref, atol=1e-5, rtol=1e-5)

    # 3) bf16 compute / f32 output (f32 accumulation in o_ref, approx sigmoid).
    out_bf16 = feed_forward_pallas(x, w1, w3, w2, compute_dtype=jnp.bfloat16)
    jax.block_until_ready(out_bf16)
    diff = jnp.abs(out_bf16.astype(jnp.float32) - ref)
    assert bool(jnp.all(jnp.isfinite(out_bf16.astype(jnp.float32))))
    assert float(jnp.max(diff)) < 5e-2

    # 4) bf16 input/output with prepared (hoisted) weights: exercises the f32
    #    scratch-accumulator variant and the prepared-weights fast path.
    prep_bf16 = prepare_ffn_weights(w1, w3, w2, th=128, compute_dtype=jnp.bfloat16)
    out_bf16_io = feed_forward_pallas_prepared(x.astype(jnp.bfloat16), prep_bf16, tm=64)
    jax.block_until_ready(out_bf16_io)
    diff2 = jnp.abs(out_bf16_io.astype(jnp.float32) - ref)
    assert out_bf16_io.dtype == jnp.bfloat16
    assert float(jnp.max(diff2)) < 5e-2

    print("KERNEL_OK")
</pallas_src>

<mosaic_0001>
module attributes {stable_mosaic.version = 11 : i64} {
  func.func @_ffn_kernel(%arg0: i32, %arg1: i32, %arg2: memref<128x128xf32, #tpu.memory_space<vmem>>, %arg3: memref<128x768xf32, #tpu.memory_space<vmem>>, %arg4: memref<384x128xf32, #tpu.memory_space<vmem>>, %arg5: memref<128x128xf32, #tpu.memory_space<vmem>>) attributes {dimension_semantics = [#tpu.dimension_semantics<parallel>, #tpu.dimension_semantics<arbitrary>], iteration_bounds = array<i64: 1, 1>, scalar_prefetch = 0 : i64, scratch_operands = 0 : i64, tpu.core_type = #tpu.core_type<tc>, window_params = [{transform_indices = @transform_0, window_bounds = array<i64: 128, 128>}, {transform_indices = @transform_1, window_bounds = array<i64: 128, 768>}, {transform_indices = @transform_2, window_bounds = array<i64: 384, 128>}, {transform_indices = @transform_3, window_bounds = array<i64: 128, 128>}]} {
    %c0 = arith.constant 0 : index
    %c0_0 = arith.constant 0 : index
    %0 = vector.load %arg2[%c0, %c0_0] : memref<128x128xf32, #tpu.memory_space<vmem>>, vector<128x128xf32>
    %c0_1 = arith.constant 0 : index
    %c0_2 = arith.constant 0 : index
    %1 = vector.load %arg3[%c0_1, %c0_2] : memref<128x768xf32, #tpu.memory_space<vmem>>, vector<128x768xf32>
    %cst = arith.constant dense<0.000000e+00> : vector<128x768xf32>
    %2 = tpu.matmul %0, %1, %cst {dimension_numbers = #tpu.dot_dimension_numbers<[1], [0], [0], [1], [0, 0, 1, 1], [], []>} : vector<128x128xf32>, vector<128x768xf32>, vector<128x768xf32> -> vector<128x768xf32>
    %3 = vector.extract_strided_slice %2 {offsets = [0, 0], sizes = [128, 384], strides = [1, 1]} : vector<128x768xf32> to vector<128x384xf32>
    %4 = vector.extract_strided_slice %2 {offsets = [0, 384], sizes = [128, 384], strides = [1, 1]} : vector<128x768xf32> to vector<128x384xf32>
    %5 = arith.negf %3 : vector<128x384xf32>
    %6 = math.exp %5 : vector<128x384xf32>
    %cst_3 = arith.constant 1.000000e+00 : f32
    %7 = vector.broadcast %cst_3 : f32 to vector<128x384xf32>
    %8 = arith.addf %7, %6 : vector<128x384xf32>
    %9 = arith.divf %7, %8 : vector<128x384xf32>
    %10 = arith.mulf %3, %9 : vector<128x384xf32>
    %11 = arith.mulf %10, %4 : vector<128x384xf32>
    %c0_4 = arith.constant 0 : index
    %c0_5 = arith.constant 0 : index
    %12 = vector.load %arg4[%c0_4, %c0_5] : memref<384x128xf32, #tpu.memory_space<vmem>>, vector<384x128xf32>
    %cst_6 = arith.constant dense<0.000000e+00> : vector<128x128xf32>
    %13 = tpu.matmul %11, %12, %cst_6 {dimension_numbers = #tpu.dot_dimension_numbers<[1], [0], [0], [1], [0, 0, 1, 1], [], []>} : vector<128x384xf32>, vector<384x128xf32>, vector<128x128xf32> -> vector<128x128xf32>
    %c0_i32 = arith.constant 0 : i32
    %14 = arith.cmpi eq, %arg1, %c0_i32 : i32
    %15 = arith.extui %14 : i1 to i32
    %c0_i32_7 = arith.constant 0 : i32
    %16 = arith.cmpi ne, %15, %c0_i32_7 : i32
    scf.if %16 {
      %c0_10 = arith.constant 0 : index
      %c0_11 = arith.constant 0 : index
      %20 = vector.load %arg5[%c0_10, %c0_11] : memref<128x128xf32, #tpu.memory_space<vmem>>, vector<128x128xf32>
      tpu.vector_store %arg5[%c0_10, %c0_11], %13 {strides = array<i32>} : memref<128x128xf32, #tpu.memory_space<vmem>>, vector<128x128xf32>,
    } else {
    }
    %c0_i32_8 = arith.constant 0 : i32
    %17 = arith.cmpi sgt, %arg1, %c0_i32_8 : i32
    %18 = arith.extui %17 : i1 to i32
    %c0_i32_9 = arith.constant 0 : i32
    %19 = arith.cmpi ne, %18, %c0_i32_9 : i32
    scf.if %19 {
      %c0_10 = arith.constant 0 : index
      %c0_11 = arith.constant 0 : index
      %20 = vector.load %arg5[%c0_10, %c0_11] : memref<128x128xf32, #tpu.memory_space<vmem>>, vector<128x128xf32>
      %21 = arith.addf %20, %13 : vector<128x128xf32>
      %c0_12 = arith.constant 0 : index
      %c0_13 = arith.constant 0 : index
      %22 = vector.load %arg5[%c0_12, %c0_13] : memref<128x128xf32, #tpu.memory_space<vmem>>, vector<128x128xf32>
      tpu.vector_store %arg5[%c0_12, %c0_13], %21 {strides = array<i32>} : memref<128x128xf32, #tpu.memory_space<vmem>>, vector<128x128xf32>,
    } else {
    }
    return
  }
  func.func @transform_0(%arg0: i32, %arg1: i32) -> (i32, i32) {
    %c0_i32 = arith.constant 0 : i32
    %c0_i32_0 = arith.constant 0 : i32
    return %arg0, %c0_i32 : i32, i32
  }
  func.func @transform_1(%arg0: i32, %arg1: i32) -> (i32, i32) {
    %c0_i32 = arith.constant 0 : i32
    %c0_i32_0 = arith.constant 0 : i32
    return %c0_i32, %arg1 : i32, i32
  }
  func.func @transform_2(%arg0: i32, %arg1: i32) -> (i32, i32) {
    %c0_i32 = arith.constant 0 : i32
    %c0_i32_0 = arith.constant 0 : i32
    return %arg1, %c0_i32 : i32, i32
  }
  func.func @transform_3(%arg0: i32, %arg1: i32) -> (i32, i32) {
    %c0_i32 = arith.constant 0 : i32
    %c0_i32_0 = arith.constant 0 : i32
    return %arg0, %c0_i32 : i32, i32
  }
}

</mosaic_0001>

<llo_original>
// kernel: tpu_custom_call.1
$region0: #{tpu_custom_call.1}
  #allocation0 [shape = 'u32[]', space=smem, size = 0x4, offset = 0x4, fixed_abs, tag = 'smem constant byte address 0x4 - core index']
  #allocation1 [shape = 'u32[144,128]{1,0:T(1,128)}', space=vmem, size = 0x12000, scoped, tag = 'internal scratch']
  %s0 = inlined_call_operand.hbm [shape: f32[128,128], index: 0, kind: input, shape index: {}]
  %s1 = inlined_call_operand.hbm [shape: f32[128,768], index: 1, kind: input, shape index: {}]
  %s2 = inlined_call_operand.hbm [shape: f32[384,128], index: 2, kind: input, shape index: {}]
  %s3 = inlined_call_operand.hbm [shape: f32[128,128], index: 3, kind: output, shape index: {}]
  %s4 = sld [smem:[#allocation0]]
  $region42: #{tpu_custom_call.1} parent=0
    _
  %s6 = ssub.s32 1, %s4
  %s7 = scalar_select 0, %s6, %s4
  $region1: #{tpu_custom_call.1} parent=0
    #allocation2 [shape = 'u8[65536]{0}', space=vmem, size = 0x10000, scoped, tag = 'input window, operand 0, single buffered']
    #allocation3 [shape = 's32[1]{0}', space=sflag, size = 0x4, scoped, tag = 'scoped memory for tpu_custom_call.1']
    #allocation4 [shape = 's32[1]{0}', space=sflag, size = 0x4, scoped, tag = 'scoped memory for tpu_custom_call.1']
    #allocation5 [shape = 'u8[393216]{0}', space=vmem, size = 0x60000, scoped, tag = 'input window, operand 1, single buffered']
    #allocation6 [shape = 's32[1]{0}', space=sflag, size = 0x4, scoped, tag = 'scoped memory for tpu_custom_call.1']
    #allocation7 [shape = 'u8[196608]{0}', space=vmem, size = 0x30000, scoped, tag = 'input window, operand 2, single buffered']
    #allocation8 [shape = 'u8[65536]{0}', space=vmem, size = 0x10000, scoped, tag = 'output window, operand 0, single buffered']
    %8 = vsyncpa [#allocation3], 0
    %9 = vsyncpa [#allocation6], 0
    %10 = vsyncpa [#allocation4], 0
    // Predicated region
    $region2: #{tpu_custom_call.1} parent=1 // pred_check
      _
    $region3: #{tpu_custom_call.1} parent=1 // pred_check_branch
      %12 = sbr.rel (0) target = $region5
    $region4: #{tpu_custom_call.1} parent=1 // pred_region
      %s14 = ssub.s32 2048, 2048
      %15 = vsyncadd [#allocation3], %s14
      %s16 = sshll.u32 [#allocation2], 4
      %s17 = int_to_ptr.vmem [resolvable:$true] %s16
      %22 = dma.hbm_to_vmem [thread:$0]  %s0, 2048, %s17, [#allocation3], 128, 128, 8
    $region5: #{tpu_custom_call.1} parent=1 // pred_fallthru
      _
    // Predicated region
    $region6: #{tpu_custom_call.1} parent=1 // pred_check
      _
    $region7: #{tpu_custom_call.1} parent=1 // pred_check_branch
      %24 = sbr.rel (0) target = $region9
    $region8: #{tpu_custom_call.1} parent=1 // pred_region
      %s26 = ssub.s32 12288, 12288
      %27 = vsyncadd [#allocation6], %s26
      %s28 = sshll.u32 [#allocation5], 4
      %s29 = int_to_ptr.vmem [resolvable:$true] %s28
      %34 = dma.hbm_to_vmem [thread:$0]  %s1, 12288, %s29, [#allocation6], 768, 768, 48
    $region9: #{tpu_custom_call.1} parent=1 // pred_fallthru
      _
    // Predicated region
    $region10: #{tpu_custom_call.1} parent=1 // pred_check
      _
    $region11: #{tpu_custom_call.1} parent=1 // pred_check_branch
      %36 = sbr.rel (0) target = $region13
    $region12: #{tpu_custom_call.1} parent=1 // pred_region
      %s38 = ssub.s32 6144, 6144
      %39 = vsyncadd [#allocation6], %s38
      %s40 = sshll.u32 [#allocation7], 4
      %s41 = int_to_ptr.vmem [resolvable:$true] %s40
      %46 = dma.hbm_to_vmem [thread:$0]  %s2, 6144, %s41, [#allocation6], 128, 128, 8
    $region13: #{tpu_custom_call.1} parent=1 // pred_fallthru
      _
    // Predicated region
    $region14: #{tpu_custom_call.1} parent=1 // pred_check
      _
    $region15: #{tpu_custom_call.1} parent=1 // pred_check_branch
      %48 = sbr.rel (0) target = $region17
    $region16: #{tpu_custom_call.1} parent=1 // pred_region
      %49 = dma.done [#allocation3], 2048
    $region17: #{tpu_custom_call.1} parent=1 // pred_fallthru
      _
    // Predicated region
    $region18: #{tpu_custom_call.1} parent=1 // pred_check
      _
    $region19: #{tpu_custom_call.1} parent=1 // pred_check_branch
      %51 = sbr.rel (0) target = $region21
    $region20: #{tpu_custom_call.1} parent=1 // pred_region
      %52 = dma.done [#allocation6], 12288
    $region21: #{tpu_custom_call.1} parent=1 // pred_fallthru
      _
    // Predicated region
    $region22: #{tpu_custom_call.1} parent=1 // pred_check
      _
    $region23: #{tpu_custom_call.1} parent=1 // pred_check_branch
      %54 = sbr.rel (0) target = $region25
    $region24: #{tpu_custom_call.1} parent=1 // pred_region
      %55 = dma.done [#allocation6], 6144
    $region25: #{tpu_custom_call.1} parent=1 // pred_fallthru
      _
    %v56 = vld [vmem:[#allocation2] sm:$0xff]
    %v57 = vld [vmem:[#allocation2 + $0x8] sm:$0xff]
    %v58 = vld [vmem:[#allocation2 + $0x10] sm:$0xff]
    %v59 = vld [vmem:[#allocation2 + $0x18] sm:$0xff]
    %v60 = vld [vmem:[#allocation2 + $0x20] sm:$0xff]
    %v61 = vld [vmem:[#allocation2 + $0x28] sm:$0xff]
    %v62 = vld [vmem:[#allocation2 + $0x30] sm:$0xff]
    %v63 = vld [vmem:[#allocation2 + $0x38] sm:$0xff]
    %v64 = vld [vmem:[#allocation2 + $0x40] sm:$0xff]
    %v65 = vld [vmem:[#allocation2 + $0x48] sm:$0xff]
    %v66 = vld [vmem:[#allocation2 + $0x50] sm:$0xff]
    %v67 = vld [vmem:[#allocation2 + $0x58] sm:$0xff]
    %v68 = vld [vmem:[#allocation2 + $0x60] sm:$0xff]
    %v69 = vld [vmem:[#allocation2 + $0x68] sm:$0xff]
    %v70 = vld [vmem:[#allocation2 + $0x70] sm:$0xff]
    %v71 = vld [vmem:[#allocation2 + $0x78] sm:$0xff]
    %v72 = vld [vmem:[#allocation5] sm:$0xff]
    %v73 = vld [vmem:[#allocation5 + $0x8] sm:$0xff]
    %v74 = vld [vmem:[#allocation5 + $0x10] sm:$0xff]
    %v75 = vld [vmem:[#allocation5 + $0x18] sm:$0xff]
    %v76 = vld [vmem:[#allocation5 + $0x20] sm:$0xff]
    %v77 = vld [vmem:[#allocation5 + $0x28] sm:$0xff]
    %v78 = vld [vmem:[#allocation5 + $0x30] sm:$0xff]
    %v79 = vld [vmem:[#allocation5 + $0x38] sm:$0xff]
    %v80 = vld [vmem:[#allocation5 + $0x40] sm:$0xff]
    %v81 = vld [vmem:[#allocation5 + $0x48] sm:$0xff]
    %v82 = vld [vmem:[#allocation5 + $0x50] sm:$0xff]
    %v83 = vld [vmem:[#allocation5 + $0x58] sm:$0xff]
    %v84 = vld [vmem:[#allocation5 + $0x60] sm:$0xff]
    %v85 = vld [vmem:[#allocation5 + $0x68] sm:$0xff]
    %v86 = vld [vmem:[#allocation5 + $0x70] sm:$0xff]
    %v87 = vld [vmem:[#allocation5 + $0x78] sm:$0xff]
    %v88 = vld [vmem:[#allocation5 + $0x80] sm:$0xff]
    %v89 = vld [vmem:[#allocation5 + $0x88] sm:$0xff]
    %v90 = vld [vmem:[#allocation5 + $0x90] sm:$0xff]
    %v91 = vld [vmem:[#allocation5 + $0x98] sm:$0xff]
    %v92 = vld [vmem:[#allocation5 + $0xa0] sm:$0xff]
    %v93 = vld [vmem:[#allocation5 + $0xa8] sm:$0xff]
    %v94 = vld [vmem:[#allocation5 + $0xb0] sm:$0xff]
    %v95 = vld [vmem:[#allocation5 + $0xb8] sm:$0xff]
    %v96 = vld [vmem:[#allocation5 + $0xc0] sm:$0xff]
    %v97 = vld [vmem:[#allocation5 + $0xc8] sm:$0xff]
    %v98 = vld [vmem:[#allocation5 + $0xd0] sm:$0xff]
    %v99 = vld [vmem:[#allocation5 + $0xd8] sm:$0xff]
    %v100 = vld [vmem:[#allocation5 + $0xe0] sm:$0xff]
    %v101 = vld [vmem:[#allocation5 + $0xe8] sm:$0xff]
    %v102 = vld [vmem:[#allocation5 + $0xf0] sm:$0xff]
    %v103 = vld [vmem:[#allocation5 + $0xf8] sm:$0xff]
    %v104 = vld [vmem:[#allocation5 + $0x100] sm:$0xff]
    %v105 = vld [vmem:[#allocation5 + $0x108] sm:$0xff]
    %v106 = vld [vmem:[#allocation5 + $0x110] sm:$0xff]
    %v107 = vld [vmem:[#allocation5 + $0x118] sm:$0xff]
    %v108 = vld [vmem:[#allocation5 + $0x120] sm:$0xff]
    %v109 = vld [vmem:[#allocation5 + $0x128] sm:$0xff]
    %v110 = vld [vmem:[#allocation5 + $0x130] sm:$0xff]
    %v111 = vld [vmem:[#allocation5 + $0x138] sm:$0xff]
    %v112 = vld [vmem:[#allocation5 + $0x140] sm:$0xff]
    %v113 = vld [vmem:[#allocation5 + $0x148] sm:$0xff]
    %v114 = vld [vmem:[#allocation5 + $0x150] sm:$0xff]
    %v115 = vld [vmem:[#allocation5 + $0x158] sm:$0xff]
    %v116 = vld [vmem:[#allocation5 + $0x160] sm:$0xff]
    %v117 = vld [vmem:[#allocation5 + $0x168] sm:$0xff]
    %v118 = vld [vmem:[#allocation5 + $0x170] sm:$0xff]
    %v119 = vld [vmem:[#allocation5 + $0x178] sm:$0xff]
    %v120 = vld [vmem:[#allocation5 + $0x180] sm:$0xff]
    %v121 = vld [vmem:[#allocation5 + $0x188] sm:$0xff]
    %v122 = vld [vmem:[#allocation5 + $0x190] sm:$0xff]
    %v123 = vld [vmem:[#allocation5 + $0x198] sm:$0xff]
    %v124 = vld [vmem:[#allocation5 + $0x1a0] sm:$0xff]
    %v125 = vld [vmem:[#allocation5 + $0x1a8] sm:$0xff]
    %v126 = vld [vmem:[#allocation5 + $0x1b0] sm:$0xff]
    %v127 = vld [vmem:[#allocation5 + $0x1b8] sm:$0xff]
    %v128 = vld [vmem:[#allocation5 + $0x1c0] sm:$0xff]
    %v129 = vld [vmem:[#allocation5 + $0x1c8] sm:$0xff]
    %v130 = vld [vmem:[#allocation5 + $0x1d0] sm:$0xff]
    %v131 = vld [vmem:[#allocation5 + $0x1d8] sm:$0xff]
    %v132 = vld [vmem:[#allocation5 + $0x1e0] sm:$0xff]
    %v133 = vld [vmem:[#allocation5 + $0x1e8] sm:$0xff]
    %v134 = vld [vmem:[#allocation5 + $0x1f0] sm:$0xff]
    %v135 = vld [vmem:[#allocation5 + $0x1f8] sm:$0xff]
    %v136 = vld [vmem:[#allocation5 + $0x200] sm:$0xff]
    %v137 = vld [vmem:[#allocation5 + $0x208] sm:$0xff]
    %v138 = vld [vmem:[#allocation5 + $0x210] sm:$0xff]
    %v139 = vld [vmem:[#allocation5 + $0x218] sm:$0xff]
    %v140 = vld [vmem:[#allocation5 + $0x220] sm:$0xff]
    %v141 = vld [vmem:[#allocation5 + $0x228] sm:$0xff]
    %v142 = vld [vmem:[#allocation5 + $0x230] sm:$0xff]
    %v143 = vld [vmem:[#allocation5 + $0x238] sm:$0xff]
    %v144 = vld [vmem:[#allocation5 + $0x240] sm:$0xff]
    %v145 = vld [vmem:[#allocation5 + $0x248] sm:$0xff]
    %v146 = vld [vmem:[#allocation5 + $0x250] sm:$0xff]
    %v147 = vld [vmem:[#allocation5 + $0x258] sm:$0xff]
    %v148 = vld [vmem:[#allocation5 + $0x260] sm:$0xff]
    %v149 = vld [vmem:[#allocation5 + $0x268] sm:$0xff]
    %v150 = vld [vmem:[#allocation5 + $0x270] sm:$0xff]
    %v151 = vld [vmem:[#allocation5 + $0x278] sm:$0xff]
    %v152 = vld [vmem:[#allocation5 + $0x280] sm:$0xff]
    %v153 = vld [vmem:[#allocation5 + $0x288] sm:$0xff]
    %v154 = vld [vmem:[#allocation5 + $0x290] sm:$0xff]
    %v155 = vld [vmem:[#allocation5 + $0x298] sm:$0xff]
    %v156 = vld [vmem:[#allocation5 + $0x2a0] sm:$0xff]
    %v157 = vld [vmem:[#allocation5 + $0x2a8] sm:$0xff]
    %v158 = vld [vmem:[#allocation5 + $0x2b0] sm:$0xff]
    %v159 = vld [vmem:[#allocation5 + $0x2b8] sm:$0xff]
    %v160 = vld [vmem:[#allocation5 + $0x2c0] sm:$0xff]
    %v161 = vld [vmem:[#allocation5 + $0x2c8] sm:$0xff]
    %v162 = vld [vmem:[#allocation5 + $0x2d0] sm:$0xff]
    %v163 = vld [vmem:[#allocation5 + $0x2d8] sm:$0xff]
    %v164 = vld [vmem:[#allocation5 + $0x2e0] sm:$0xff]
    %v165 = vld [vmem:[#allocation5 + $0x2e8] sm:$0xff]
    %v166 = vld [vmem:[#allocation5 + $0x2f0] sm:$0xff]
    %v167 = vld [vmem:[#allocation5 + $0x2f8] sm:$0xff]
    %168 = vmatprep.subr.mxu0 %v163
    %169 = vmatpush1.msra.mxu0 %v162
    %170 = vmatprep.subr.mxu0 %v157
    %171 = vmatpush1.msra.mxu0 %v156
    %172 = vmatprep.subr.mxu0 %v151
    %173 = vmatpush1.msra.mxu0 %v150
    %174 = vmatprep.subr.mxu0 %v145
    %175 = vmatpush1.msra.mxu0 %v144
    %176 = vmatprep.subr.mxu0 %v139
    %177 = vmatpush1.msra.mxu0 %v138
    %178 = vmatprep.subr.mxu0 %v133
    %179 = vmatpush1.msra.mxu0 %v132
    %180 = vmatprep.subr.mxu0 %v127
    %181 = vmatpush1.msra.mxu0 %v126
    %182 = vmatprep.subr.mxu0 %v121
    %183 = vmatpush1.msra.mxu0 %v120
    %184 = vmatprep.subr.mxu0 %v115
    %185 = vmatpush1.msra.mxu0 %v114
    %186 = vmatprep.subr.mxu0 %v109
    %187 = vmatpush1.msra.mxu0 %v108
    %188 = vmatprep.subr.mxu0 %v103
    %189 = vmatpush1.msra.mxu0 %v102
    %190 = vmatprep.subr.mxu0 %v97
    %191 = vmatpush1.msra.mxu0 %v96
    %192 = vmatprep.subr.mxu0 %v91
    %193 = vmatpush1.msra.mxu0 %v90
    %194 = vmatprep.subr.mxu0 %v85
    %195 = vmatpush1.msra.mxu0 %v84
    %196 = vmatprep.subr.mxu0 %v79
    %197 = vmatpush1.msra.mxu0 %v78
    %198 = vmatprep.subr.mxu0 %v73
    %199 = vmatpush1.msra.mxu0 %v72
    %200 = vmatprep.subr.mxu0 0.0
    %201 = vmatpush2.msra.mxu0 0.0
    %202 = vmatprep.subr.mxu0 0.0
    %203 = vmatpush2.msra.mxu0 0.0
    %204 = vmatprep.subr.mxu0 0.0
    %205 = vmatpush2.msra.mxu0 0.0
    %206 = vmatprep.subr.mxu0 0.0
    %207 = vmatpush2.msra.mxu0 0.0
    %208 = vmatprep.subr.mxu0 0.0
    %209 = vmatpush2.msra.mxu0 0.0
    %210 = vmatprep.subr.mxu0 0.0
    %211 = vmatpush2.msra.mxu0 0.0
    %212 = vmatprep.subr.mxu0 0.0
    %213 = vmatpush2.msra.mxu0 0.0
    %214 = vmatprep.subr.mxu0 0.0
    %215 = vmatpush2.msra.mxu0 0.0
    %216 = vmatprep.subr.mxu0 0.0
    %217 = vmatpush2.msra.mxu0 0.0
    %218 = vmatprep.subr.mxu0 0.0
    %219 = vmatpush2.msra.mxu0 0.0
    %220 = vmatprep.subr.mxu0 0.0
    %221 = vmatpush2.msra.mxu0 0.0
    %222 = vmatprep.subr.mxu0 0.0
    %223 = vmatpush2.msra.mxu0 0.0
    %224 = vmatprep.subr.mxu0 0.0
    %225 = vmatpush2.msra.mxu0 0.0
    %226 = vmatprep.subr.mxu0 0.0
    %227 = vmatpush2.msra.mxu0 0.0
    %228 = vmatprep.subr.mxu0 0.0
    %229 = vmatpush2.msra.mxu0 0.0
    %230 = vmatprep.subr.mxu0 0.0
    %231 = vmatpush2.msra.mxu0 0.0
    %232 = vmatprep.mubr.f32.mxu0 0.0
    %233 = vmatmul.mubr.f32.gmra.mxu0 %v56
    %v234 = vpop.f32.mrf.mxu0
    %v235 = vadd.f32 0.0, %v234
    %v236 = vpop.f32.mrf.mxu0
    %v237 = vadd.f32 0.0, %v236
    %238 = vmatprep.mubr.f32.mxu0 0.0
    %239 = vmatmul.mubr.f32.gmra.mxu0 %v57
    %v240 = vpop.f32.mrf.mxu0
    %v241 = vadd.f32 0.0, %v240
    %v242 = vpop.f32.mrf.mxu0
    %v243 = vadd.f32 0.0, %v242
    %244 = vmatprep.mubr.f32.mxu0 0.0
    %245 = vmatmul.mubr.f32.gmra.mxu0 %v58
    %v246 = vpop.f32.mrf.mxu0
    %v247 = vadd.f32 0.0, %v246
    %v248 = vpop.f32.mrf.mxu0
    %v249 = vadd.f32 0.0, %v248
    %250 = vmatprep.mubr.f32.mxu0 0.0
    %251 = vmatmul.mubr.f32.gmra.mxu0 %v59
    %v252 = vpop.f32.mrf.mxu0
    %v253 = vadd.f32 0.0, %v252
    %v254 = vpop.f32.mrf.mxu0
    %v255 = vadd.f32 0.0, %v254
    %256 = vmatprep.mubr.f32.mxu0 0.0
    %257 = vmatmul.mubr.f32.gmra.mxu0 %v60
    %v258 = vpop.f32.mrf.mxu0
    %v259 = vadd.f32 0.0, %v258
    %v260 = vpop.f32.mrf.mxu0
    %v261 = vadd.f32 0.0, %v260
    %262 = vmatprep.mubr.f32.mxu0 0.0
    %263 = vmatmul.mubr.f32.gmra.mxu0 %v61
    %v264 = vpop.f32.mrf.mxu0
    %v265 = vadd.f32 0.0, %v264
    %v266 = vpop.f32.mrf.mxu0
    %v267 = vadd.f32 0.0, %v266
    %268 = vmatprep.mubr.f32.mxu0 0.0
    %269 = vmatmul.mubr.f32.gmra.mxu0 %v62
    %v270 = vpop.f32.mrf.mxu0
    %v271 = vadd.f32 0.0, %v270
    %v272 = vpop.f32.mrf.mxu0
    %v273 = vadd.f32 0.0, %v272
    %274 = vmatprep.mubr.f32.mxu0 0.0
    %275 = vmatmul.mubr.f32.gmra.mxu0 %v63
    %v276 = vpop.f32.mrf.mxu0
    %v277 = vadd.f32 0.0, %v276
    %v278 = vpop.f32.mrf.mxu0
    %v279 = vadd.f32 0.0, %v278
    %280 = vmatprep.mubr.f32.mxu0 0.0
    %281 = vmatmul.mubr.f32.gmra.mxu0 %v64
    %v282 = vpop.f32.mrf.mxu0
    %v283 = vadd.f32 0.0, %v282
    %v284 = vpop.f32.mrf.mxu0
    %v285 = vadd.f32 0.0, %v284
    %286 = vmatprep.mubr.f32.mxu0 0.0
    %287 = vmatmul.mubr.f32.gmra.mxu0 %v65
    %v288 = vpop.f32.mrf.mxu0
    %v289 = vadd.f32 0.0, %v288
    %v290 = vpop.f32.mrf.mxu0
    %v291 = vadd.f32 0.0, %v290
    %292 = vmatprep.mubr.f32.mxu0 0.0
    %293 = vmatmul.mubr.f32.gmra.mxu0 %v66
    %v294 = vpop.f32.mrf.mxu0
    %v295 = vadd.f32 0.0, %v294
    %v296 = vpop.f32.mrf.mxu0
    %v297 = vadd.f32 0.0, %v296
    %298 = vmatprep.mubr.f32.mxu0 0.0
    %299 = vmatmul.mubr.f32.gmra.mxu0 %v67
    %v300 = vpop.f32.mrf.mxu0
    %v301 = vadd.f32 0.0, %v300
    %v302 = vpop.f32.mrf.mxu0
    %v303 = vadd.f32 0.0, %v302
    %304 = vmatprep.mubr.f32.mxu0 0.0
    %305 = vmatmul.mubr.f32.gmra.mxu0 %v68
    %v306 = vpop.f32.mrf.mxu0
    %v307 = vadd.f32 0.0, %v306
    %v308 = vpop.f32.mrf.mxu0
    %v309 = vadd.f32 0.0, %v308
    %310 = vmatprep.mubr.f32.mxu0 0.0
    %311 = vmatmul.mubr.f32.gmra.mxu0 %v69
    %v312 = vpop.f32.mrf.mxu0
    %v313 = vadd.f32 0.0, %v312
    %v314 = vpop.f32.mrf.mxu0
    %v315 = vadd.f32 0.0, %v314
    %316 = vmatprep.mubr.f32.mxu0 0.0
    %317 = vmatmul.mubr.f32.gmra.mxu0 %v70
    %v318 = vpop.f32.mrf.mxu0
    %v319 = vadd.f32 0.0, %v318
    %v320 = vpop.f32.mrf.mxu0
    %v321 = vadd.f32 0.0, %v320
    %322 = vmatprep.mubr.f32.mxu0 0.0
    %323 = vmatmul.mubr.f32.gmra.mxu0 %v71
    %v324 = vpop.f32.mrf.mxu0
    %v325 = vadd.f32 0.0, %v324
    %v326 = vpop.f32.mrf.mxu0
    %v327 = vadd.f32 0.0, %v326
    %328 = vdwg.mxu0
    %329 = vmatprep.subr.mxu0 %v165
    %330 = vmatpush1.msra.mxu0 %v164
    %331 = vmatprep.subr.mxu0 %v159
    %332 = vmatpush1.msra.mxu0 %v158
    %333 = vmatprep.subr.mxu0 %v153
    %334 = vmatpush1.msra.mxu0 %v152
    %335 = vmatprep.subr.mxu0 %v147
    %336 = vmatpush1.msra.mxu0 %v146
    %337 = vmatprep.subr.mxu0 %v141
    %338 = vmatpush1.msra.mxu0 %v140
    %339 = vmatprep.subr.mxu0 %v135
    %340 = vmatpush1.msra.mxu0 %v134
    %341 = vmatprep.subr.mxu0 %v129
    %342 = vmatpush1.msra.mxu0 %v128
    %343 = vmatprep.subr.mxu0 %v123
    %344 = vmatpush1.msra.mxu0 %v122
    %345 = vmatprep.subr.mxu0 %v117
    %346 = vmatpush1.msra.mxu0 %v116
    %347 = vmatprep.subr.mxu0 %v111
    %348 = vmatpush1.msra.mxu0 %v110
    %349 = vmatprep.subr.mxu0 %v105
    %350 = vmatpush1.msra.mxu0 %v104
    %351 = vmatprep.subr.mxu0 %v99
    %352 = vmatpush1.msra.mxu0 %v98
    %353 = vmatprep.subr.mxu0 %v93
    %354 = vmatpush1.msra.mxu0 %v92
    %355 = vmatprep.subr.mxu0 %v87
    %356 = vmatpush1.msra.mxu0 %v86
    %357 = vmatprep.subr.mxu0 %v81
    %358 = vmatpush1.msra.mxu0 %v80
    %359 = vmatprep.subr.mxu0 %v75
    %360 = vmatpush1.msra.mxu0 %v74
    %361 = vmatprep.subr.mxu0 0.0
    %362 = vmatpush2.msra.mxu0 0.0
    %363 = vmatprep.subr.mxu0 0.0
    %364 = vmatpush2.msra.mxu0 0.0
    %365 = vmatprep.subr.mxu0 0.0
    %366 = vmatpush2.msra.mxu0 0.0
    %367 = vmatprep.subr.mxu0 0.0
    %368 = vmatpush2.msra.mxu0 0.0
    %369 = vmatprep.subr.mxu0 0.0
    %370 = vmatpush2.msra.mxu0 0.0
    %371 = vmatprep.subr.mxu0 0.0
    %372 = vmatpush2.msra.mxu0 0.0
    %373 = vmatprep.subr.mxu0 0.0
    %374 = vmatpush2.msra.mxu0 0.0
    %375 = vmatprep.subr.mxu0 0.0
    %376 = vmatpush2.msra.mxu0 0.0
    %377 = vmatprep.subr.mxu0 0.0
    %378 = vmatpush2.msra.mxu0 0.0
    %379 = vmatprep.subr.mxu0 0.0
    %380 = vmatpush2.msra.mxu0 0.0
    %381 = vmatprep.subr.mxu0 0.0
    %382 = vmatpush2.msra.mxu0 0.0
    %383 = vmatprep.subr.mxu0 0.0
    %384 = vmatpush2.msra.mxu0 0.0
    %385 = vmatprep.subr.mxu0 0.0
    %386 = vmatpush2.msra.mxu0 0.0
    %387 = vmatprep.subr.mxu0 0.0
    %388 = vmatpush2.msra.mxu0 0.0
    %389 = vmatprep.subr.mxu0 0.0
    %390 = vmatpush2.msra.mxu0 0.0
    %391 = vmatprep.subr.mxu0 0.0
    %392 = vmatpush2.msra.mxu0 0.0
    %393 = vmatprep.mubr.f32.mxu0 0.0
    %394 = vmatmul.mubr.f32.gmra.mxu0 %v56
    %v395 = vpop.f32.mrf.mxu0
    %v396 = vadd.f32 0.0, %v395
    %v397 = vpop.f32.mrf.mxu0
    %v398 = vadd.f32 0.0, %v397
    %399 = vmatprep.mubr.f32.mxu0 0.0
    %400 = vmatmul.mubr.f32.gmra.mxu0 %v57
    %v401 = vpop.f32.mrf.mxu0
    %v402 = vadd.f32 0.0, %v401
    %v403 = vpop.f32.mrf.mxu0
    %v404 = vadd.f32 0.0, %v403
    %405 = vmatprep.mubr.f32.mxu0 0.0
    %406 = vmatmul.mubr.f32.gmra.mxu0 %v58
    %v407 = vpop.f32.mrf.mxu0
    %v408 = vadd.f32 0.0, %v407
    %v409 = vpop.f32.mrf.mxu0
    %v410 = vadd.f32 0.0, %v409
    %411 = vmatprep.mubr.f32.mxu0 0.0
    %412 = vmatmul.mubr.f32.gmra.mxu0 %v59
    %v413 = vpop.f32.mrf.mxu0
    %v414 = vadd.f32 0.0, %v413
    %v415 = vpop.f32.mrf.mxu0
    %v416 = vadd.f32 0.0, %v415
    %417 = vmatprep.mubr.f32.mxu0 0.0
    %418 = vmatmul.mubr.f32.gmra.mxu0 %v60
    %v419 = vpop.f32.mrf.mxu0
    %v420 = vadd.f32 0.0, %v419
    %v421 = vpop.f32.mrf.mxu0
    %v422 = vadd.f32 0.0, %v421
    %423 = vmatprep.mubr.f32.mxu0 0.0
    %424 = vmatmul.mubr.f32.gmra.mxu0 %v61
    %v425 = vpop.f32.mrf.mxu0
    %v426 = vadd.f32 0.0, %v425
    %v427 = vpop.f32.mrf.mxu0
    %v428 = vadd.f32 0.0, %v427
    %429 = vmatprep.mubr.f32.mxu0 0.0
    %430 = vmatmul.mubr.f32.gmra.mxu0 %v62
    %v431 = vpop.f32.mrf.mxu0
    %v432 = vadd.f32 0.0, %v431
    %v433 = vpop.f32.mrf.mxu0
    %v434 = vadd.f32 0.0, %v433
    %435 = vmatprep.mubr.f32.mxu0 0.0
    %436 = vmatmul.mubr.f32.gmra.mxu0 %v63
    %v437 = vpop.f32.mrf.mxu0
    %v438 = vadd.f32 0.0, %v437
    %v439 = vpop.f32.mrf.mxu0
    %v440 = vadd.f32 0.0, %v439
    %441 = vmatprep.mubr.f32.mxu0 0.0
    %442 = vmatmul.mubr.f32.gmra.mxu0 %v64
    %v443 = vpop.f32.mrf.mxu0
    %v444 = vadd.f32 0.0, %v443
    %v445 = vpop.f32.mrf.mxu0
    %v446 = vadd.f32 0.0, %v445
    %447 = vmatprep.mubr.f32.mxu0 0.0
    %448 = vmatmul.mubr.f32.gmra.mxu0 %v65
    %v449 = vpop.f32.mrf.mxu0
    %v450 = vadd.f32 0.0, %v449
    %v451 = vpop.f32.mrf.mxu0
    %v452 = vadd.f32 0.0, %v451
    %453 = vmatprep.mubr.f32.mxu0 0.0
    %454 = vmatmul.mubr.f32.gmra.mxu0 %v66
    %v455 = vpop.f32.mrf.mxu0
    %v456 = vadd.f32 0.0, %v455
    %v457 = vpop.f32.mrf.mxu0
    %v458 = vadd.f32 0.0, %v457
    %459 = vmatprep.mubr.f32.mxu0 0.0
    %460 = vmatmul.mubr.f32.gmra.mxu0 %v67
    %v461 = vpop.f32.mrf.mxu0
    %v462 = vadd.f32 0.0, %v461
    %v463 = vpop.f32.mrf.mxu0
    %v464 = vadd.f32 0.0, %v463
    %465 = vmatprep.mubr.f32.mxu0 0.0
    %466 = vmatmul.mubr.f32.gmra.mxu0 %v68
    %v467 = vpop.f32.mrf.mxu0
    %v468 = vadd.f32 0.0, %v467
    %v469 = vpop.f32.mrf.mxu0
    %v470 = vadd.f32 0.0, %v469
    %471 = vmatprep.mubr.f32.mxu0 0.0
    %472 = vmatmul.mubr.f32.gmra.mxu0 %v69
    %v473 = vpop.f32.mrf.mxu0
    %v474 = vadd.f32 0.0, %v473
    %v475 = vpop.f32.mrf.mxu0
    %v476 = vadd.f32 0.0, %v475
    %477 = vmatprep.mubr.f32.mxu0 0.0
    %478 = vmatmul.mubr.f32.gmra.mxu0 %v70
    %v479 = vpop.f32.mrf.mxu0
    %v480 = vadd.f32 0.0, %v479
    %v481 = vpop.f32.mrf.mxu0
    %v482 = vadd.f32 0.0, %v481
    %483 = vmatprep.mubr.f32.mxu0 0.0
    %484 = vmatmul.mubr.f32.gmra.mxu0 %v71
    %v485 = vpop.f32.mrf.mxu0
    %v486 = vadd.f32 0.0, %v485
    %v487 = vpop.f32.mrf.mxu0
    %v488 = vadd.f32 0.0, %v487
    %489 = vdwg.mxu0
    %490 = vmatprep.subr.mxu0 %v167
    %491 = vmatpush1.msra.mxu0 %v166
    %492 = vmatprep.subr.mxu0 %v161
    %493 = vmatpush1.msra.mxu0 %v160
    %494 = vmatprep.subr.mxu0 %v155
    %495 = vmatpush1.msra.mxu0 %v154
    %496 = vmatprep.subr.mxu0 %v149
    %497 = vmatpush1.msra.mxu0 %v148
    %498 = vmatprep.subr.mxu0 %v143
    %499 = vmatpush1.msra.mxu0 %v142
    %500 = vmatprep.subr.mxu0 %v137
    %501 = vmatpush1.msra.mxu0 %v136
    %502 = vmatprep.subr.mxu0 %v131
    %503 = vmatpush1.msra.mxu0 %v130
    %504 = vmatprep.subr.mxu0 %v125
    %505 = vmatpush1.msra.mxu0 %v124
    %506 = vmatprep.subr.mxu0 %v119
    %507 = vmatpush1.msra.mxu0 %v118
    %508 = vmatprep.subr.mxu0 %v113
    %509 = vmatpush1.msra.mxu0 %v112
    %510 = vmatprep.subr.mxu0 %v107
    %511 = vmatpush1.msra.mxu0 %v106
    %512 = vmatprep.subr.mxu0 %v101
    %513 = vmatpush1.msra.mxu0 %v100
    %514 = vmatprep.subr.mxu0 %v95
    %515 = vmatpush1.msra.mxu0 %v94
    %516 = vmatprep.subr.mxu0 %v89
    %517 = vmatpush1.msra.mxu0 %v88
    %518 = vmatprep.subr.mxu0 %v83
    %519 = vmatpush1.msra.mxu0 %v82
    %520 = vmatprep.subr.mxu0 %v77
    %521 = vmatpush1.msra.mxu0 %v76
    %522 = vmatprep.subr.mxu0 0.0
    %523 = vmatpush2.msra.mxu0 0.0
    %524 = vmatprep.subr.mxu0 0.0
    %525 = vmatpush2.msra.mxu0 0.0
    %526 = vmatprep.subr.mxu0 0.0
    %527 = vmatpush2.msra.mxu0 0.0
    %528 = vmatprep.subr.mxu0 0.0
    %529 = vmatpush2.msra.mxu0 0.0
    %530 = vmatprep.subr.mxu0 0.0
    %531 = vmatpush2.msra.mxu0 0.0
    %532 = vmatprep.subr.mxu0 0.0
    %533 = vmatpush2.msra.mxu0 0.0
    %534 = vmatprep.subr.mxu0 0.0
    %535 = vmatpush2.msra.mxu0 0.0
    %536 = vmatprep.subr.mxu0 0.0
    %537 = vmatpush2.msra.mxu0 0.0
    %538 = vmatprep.subr.mxu0 0.0
    %539 = vmatpush2.msra.mxu0 0.0
    %540 = vmatprep.subr.mxu0 0.0
    %541 = vmatpush2.msra.mxu0 0.0
    %542 = vmatprep.subr.mxu0 0.0
    %543 = vmatpush2.msra.mxu0 0.0
    %544 = vmatprep.subr.mxu0 0.0
    %545 = vmatpush2.msra.mxu0 0.0
    %546 = vmatprep.subr.mxu0 0.0
    %547 = vmatpush2.msra.mxu0 0.0
    %548 = vmatprep.subr.mxu0 0.0
    %549 = vmatpush2.msra.mxu0 0.0
    %550 = vmatprep.subr.mxu0 0.0
    %551 = vmatpush2.msra.mxu0 0.0
    %552 = vmatprep.subr.mxu0 0.0
    %553 = vmatpush2.msra.mxu0 0.0
    %554 = vmatprep.mubr.f32.mxu0 0.0
    %555 = vmatmul.mubr.f32.gmra.mxu0 %v56
    %v556 = vpop.f32.mrf.mxu0
    %v557 = vadd.f32 0.0, %v556
    %v558 = vpop.f32.mrf.mxu0
    %v559 = vadd.f32 0.0, %v558
    %560 = vmatprep.mubr.f32.mxu0 0.0
    %561 = vmatmul.mubr.f32.gmra.mxu0 %v57
    %v562 = vpop.f32.mrf.mxu0
    %v563 = vadd.f32 0.0, %v562
    %v564 = vpop.f32.mrf.mxu0
    %v565 = vadd.f32 0.0, %v564
    %566 = vmatprep.mubr.f32.mxu0 0.0
    %567 = vmatmul.mubr.f32.gmra.mxu0 %v58
    %v568 = vpop.f32.mrf.mxu0
    %v569 = vadd.f32 0.0, %v568
    %v570 = vpop.f32.mrf.mxu0
    %v571 = vadd.f32 0.0, %v570
    %572 = vmatprep.mubr.f32.mxu0 0.0
    %573 = vmatmul.mubr.f32.gmra.mxu0 %v59
    %v574 = vpop.f32.mrf.mxu0
    %v575 = vadd.f32 0.0, %v574
    %v576 = vpop.f32.mrf.mxu0
    %v577 = vadd.f32 0.0, %v576
    %578 = vmatprep.mubr.f32.mxu0 0.0
    %579 = vmatmul.mubr.f32.gmra.mxu0 %v60
    %v580 = vpop.f32.mrf.mxu0
    %v581 = vadd.f32 0.0, %v580
    %v582 = vpop.f32.mrf.mxu0
    %v583 = vadd.f32 0.0, %v582
    %584 = vmatprep.mubr.f32.mxu0 0.0
    %585 = vmatmul.mubr.f32.gmra.mxu0 %v61
    %v586 = vpop.f32.mrf.mxu0
    %v587 = vadd.f32 0.0, %v586
    %v588 = vpop.f32.mrf.mxu0
    %v589 = vadd.f32 0.0, %v588
    %590 = vmatprep.mubr.f32.mxu0 0.0
    %591 = vmatmul.mubr.f32.gmra.mxu0 %v62
    %v592 = vpop.f32.mrf.mxu0
    %v593 = vadd.f32 0.0, %v592
    %v594 = vpop.f32.mrf.mxu0
    %v595 = vadd.f32 0.0, %v594
    %596 = vmatprep.mubr.f32.mxu0 0.0
    %597 = vmatmul.mubr.f32.gmra.mxu0 %v63
    %v598 = vpop.f32.mrf.mxu0
    %v599 = vadd.f32 0.0, %v598
    %v600 = vpop.f32.mrf.mxu0
    %v601 = vadd.f32 0.0, %v600
    %602 = vmatprep.mubr.f32.mxu0 0.0
    %603 = vmatmul.mubr.f32.gmra.mxu0 %v64
    %v604 = vpop.f32.mrf.mxu0
    %v605 = vadd.f32 0.0, %v604
    %v606 = vpop.f32.mrf.mxu0
    %v607 = vadd.f32 0.0, %v606
    %608 = vmatprep.mubr.f32.mxu0 0.0
    %609 = vmatmul.mubr.f32.gmra.mxu0 %v65
    %v610 = vpop.f32.mrf.mxu0
    %v611 = vadd.f32 0.0, %v610
    %v612 = vpop.f32.mrf.mxu0
    %v613 = vadd.f32 0.0, %v612
    %614 = vmatprep.mubr.f32.mxu0 0.0
    %615 = vmatmul.mubr.f32.gmra.mxu0 %v66
    %v616 = vpop.f32.mrf.mxu0
    %v617 = vadd.f32 0.0, %v616
    %v618 = vpop.f32.mrf.mxu0
    %v619 = vadd.f32 0.0, %v618
    %620 = vmatprep.mubr.f32.mxu0 0.0
    %621 = vmatmul.mubr.f32.gmra.mxu0 %v67
    %v622 = vpop.f32.mrf.mxu0
    %v623 = vadd.f32 0.0, %v622
    %v624 = vpop.f32.mrf.mxu0
    %v625 = vadd.f32 0.0, %v624
    %626 = vmatprep.mubr.f32.mxu0 0.0
    %627 = vmatmul.mubr.f32.gmra.mxu0 %v68
    %v628 = vpop.f32.mrf.mxu0
    %v629 = vadd.f32 0.0, %v628
    %v630 = vpop.f32.mrf.mxu0
    %v631 = vadd.f32 0.0, %v630
    %632 = vmatprep.mubr.f32.mxu0 0.0
    %633 = vmatmul.mubr.f32.gmra.mxu0 %v69
    %v634 = vpop.f32.mrf.mxu0
    %v635 = vadd.f32 0.0, %v634
    %v636 = vpop.f32.mrf.mxu0
    %v637 = vadd.f32 0.0, %v636
    %638 = vmatprep.mubr.f32.mxu0 0.0
    %639 = vmatmul.mubr.f32.gmra.mxu0 %v70
    %v640 = vpop.f32.mrf.mxu0
    %v641 = vadd.f32 0.0, %v640
    %v642 = vpop.f32.mrf.mxu0
    %v643 = vadd.f32 0.0, %v642
    %644 = vmatprep.mubr.f32.mxu0 0.0
    %645 = vmatmul.mubr.f32.gmra.mxu0 %v71
    %v646 = vpop.f32.mrf.mxu0
    %v647 = vadd.f32 0.0, %v646
    %v648 = vpop.f32.mrf.mxu0
    %v649 = vadd.f32 0.0, %v648
    %650 = vdwg.mxu0
    %v651 = vxor.u32 %v235, 2147483648
    %v652 = vxor.u32 %v237, 2147483648
    %v653 = vxor.u32 %v396, 2147483648
    %v654 = vxor.u32 %v241, 2147483648
    %v655 = vxor.u32 %v243, 2147483648
    %v656 = vxor.u32 %v402, 2147483648
    %v657 = vxor.u32 %v247, 2147483648
    %v658 = vxor.u32 %v249, 2147483648
    %v659 = vxor.u32 %v408, 2147483648
    %v660 = vxor.u32 %v253, 2147483648
    %v661 = vxor.u32 %v255, 2147483648
    %v662 = vxor.u32 %v414, 2147483648
    %v663 = vxor.u32 %v259, 2147483648
    %v664 = vxor.u32 %v261, 2147483648
    %v665 = vxor.u32 %v420, 2147483648
    %v666 = vxor.u32 %v265, 2147483648
    %v667 = vxor.u32 %v267, 2147483648
    %v668 = vxor.u32 %v426, 2147483648
    %v669 = vxor.u32 %v271, 2147483648
    %v670 = vxor.u32 %v273, 2147483648
    %v671 = vxor.u32 %v432, 2147483648
    %v672 = vxor.u32 %v277, 2147483648
    %v673 = vxor.u32 %v279, 2147483648
    %v674 = vxor.u32 %v438, 2147483648
    %v675 = vxor.u32 %v283, 2147483648
    %v676 = vxor.u32 %v285, 2147483648
    %v677 = vxor.u32 %v444, 2147483648
    %v678 = vxor.u32 %v289, 2147483648
    %v679 = vxor.u32 %v291, 2147483648
    %v680 = vxor.u32 %v450, 2147483648
    %v681 = vxor.u32 %v295, 2147483648
    %v682 = vxor.u32 %v297, 2147483648
    %v683 = vxor.u32 %v456, 2147483648
    %v684 = vxor.u32 %v301, 2147483648
    %v685 = vxor.u32 %v303, 2147483648
    %v686 = vxor.u32 %v462, 2147483648
    %v687 = vxor.u32 %v307, 2147483648
    %v688 = vxor.u32 %v309, 2147483648
    %v689 = vxor.u32 %v468, 2147483648
    %v690 = vxor.u32 %v313, 2147483648
    %v691 = vxor.u32 %v315, 2147483648
    %v692 = vxor.u32 %v474, 2147483648
    %v693 = vxor.u32 %v319, 2147483648
    %v694 = vxor.u32 %v321, 2147483648
    %v695 = vxor.u32 %v480, 2147483648
    %v696 = vxor.u32 %v325, 2147483648
    %v697 = vxor.u32 %v327, 2147483648
    %v698 = vxor.u32 %v486, 2147483648
    %v699 = vmul.f32 %v651, 1.442695
    %v700 = vpow.pop %v699
    %v701 = vmul.f32 %v652, 1.442695
    %v702 = vpow.pop %v701
    %v703 = vmul.f32 %v653, 1.442695
    %v704 = vpow.pop %v703
    %v705 = vmul.f32 %v654, 1.442695
    %v706 = vpow.pop %v705
    %v707 = vmul.f32 %v655, 1.442695
    %v708 = vpow.pop %v707
    %v709 = vmul.f32 %v656, 1.442695
    %v710 = vpow.pop %v709
    %v711 = vmul.f32 %v657, 1.442695
    %v712 = vpow.pop %v711
    %v713 = vmul.f32 %v658, 1.442695
    %v714 = vpow.pop %v713
    %v715 = vmul.f32 %v659, 1.442695
    %v716 = vpow.pop %v715
    %v717 = vmul.f32 %v660, 1.442695
    %v718 = vpow.pop %v717
    %v719 = vmul.f32 %v661, 1.442695
    %v720 = vpow.pop %v719
    %v721 = vmul.f32 %v662, 1.442695
    %v722 = vpow.pop %v721
    %v723 = vmul.f32 %v663, 1.442695
    %v724 = vpow.pop %v723
    %v725 = vmul.f32 %v664, 1.442695
    %v726 = vpow.pop %v725
    %v727 = vmul.f32 %v665, 1.442695
    %v728 = vpow.pop %v727
    %v729 = vmul.f32 %v666, 1.442695
    %v730 = vpow.pop %v729
    %v731 = vmul.f32 %v667, 1.442695
    %v732 = vpow.pop %v731
    %v733 = vmul.f32 %v668, 1.442695
    %v734 = vpow.pop %v733
    %v735 = vmul.f32 %v669, 1.442695
    %v736 = vpow.pop %v735
    %v737 = vmul.f32 %v670, 1.442695
    %v738 = vpow.pop %v737
    %v739 = vmul.f32 %v671, 1.442695
    %v740 = vpow.pop %v739
    %v741 = vmul.f32 %v672, 1.442695
    %v742 = vpow.pop %v741
    %v743 = vmul.f32 %v673, 1.442695
    %v744 = vpow.pop %v743
    %v745 = vmul.f32 %v674, 1.442695
    %v746 = vpow.pop %v745
    %v747 = vmul.f32 %v675, 1.442695
    %v748 = vpow.pop %v747
    %v749 = vmul.f32 %v676, 1.442695
    %v750 = vpow.pop %v749
    %v751 = vmul.f32 %v677, 1.442695
    %v752 = vpow.pop %v751
    %v753 = vmul.f32 %v678, 1.442695
    %v754 = vpow.pop %v753
    %v755 = vmul.f32 %v679, 1.442695
    %v756 = vpow.pop %v755
    %v757 = vmul.f32 %v680, 1.442695
    %v758 = vpow.pop %v757
    %v759 = vmul.f32 %v681, 1.442695
    %v760 = vpow.pop %v759
    %v761 = vmul.f32 %v682, 1.442695
    %v762 = vpow.pop %v761
    %v763 = vmul.f32 %v683, 1.442695
    %v764 = vpow.pop %v763
    %v765 = vmul.f32 %v684, 1.442695
    %v766 = vpow.pop %v765
    %v767 = vmul.f32 %v685, 1.442695
    %v768 = vpow.pop %v767
    %v769 = vmul.f32 %v686, 1.442695
    %v770 = vpow.pop %v769
    %v771 = vmul.f32 %v687, 1.442695
    %v772 = vpow.pop %v771
    %v773 = vmul.f32 %v688, 1.442695
    %v774 = vpow.pop %v773
    %v775 = vmul.f32 %v689, 1.442695
    %v776 = vpow.pop %v775
    %v777 = vmul.f32 %v690, 1.442695
    %v778 = vpow.pop %v777
    %v779 = vmul.f32 %v691, 1.442695
    %v780 = vpow.pop %v779
    %v781 = vmul.f32 %v692, 1.442695
    %v782 = vpow.pop %v781
    %v783 = vmul.f32 %v693, 1.442695
    %v784 = vpow.pop %v783
    %v785 = vmul.f32 %v694, 1.442695
    %v786 = vpow.pop %v785
    %v787 = vmul.f32 %v695, 1.442695
    %v788 = vpow.pop %v787
    %v789 = vmul.f32 %v696, 1.442695
    %v790 = vpow.pop %v789
    %v791 = vmul.f32 %v697, 1.442695
    %v792 = vpow.pop %v791
    %v793 = vmul.f32 %v698, 1.442695
    %v794 = vpow.pop %v793
    %v795 = vadd.f32 %v700, 1.0
    %v796 = vadd.f32 %v702, 1.0
    %v797 = vadd.f32 %v704, 1.0
    %v798 = vadd.f32 %v706, 1.0
    %v799 = vadd.f32 %v708, 1.0
    %v800 = vadd.f32 %v710, 1.0
    %v801 = vadd.f32 %v712, 1.0
    %v802 = vadd.f32 %v714, 1.0
    %v803 = vadd.f32 %v716, 1.0
    %v804 = vadd.f32 %v718, 1.0
    %v805 = vadd.f32 %v720, 1.0
    %v806 = vadd.f32 %v722, 1.0
    %v807 = vadd.f32 %v724, 1.0
    %v808 = vadd.f32 %v726, 1.0
    %v809 = vadd.f32 %v728, 1.0
    %v810 = vadd.f32 %v730, 1.0
    %v811 = vadd.f32 %v732, 1.0
    %v812 = vadd.f32 %v734, 1.0
    %v813 = vadd.f32 %v736, 1.0
    %v814 = vadd.f32 %v738, 1.0
    %v815 = vadd.f32 %v740, 1.0
    %v816 = vadd.f32 %v742, 1.0
    %v817 = vadd.f32 %v744, 1.0
    %v818 = vadd.f32 %v746, 1.0
    %v819 = vadd.f32 %v748, 1.0
    %v820 = vadd.f32 %v750, 1.0
    %v821 = vadd.f32 %v752, 1.0
    %v822 = vadd.f32 %v754, 1.0
    %v823 = vadd.f32 %v756, 1.0
    %v824 = vadd.f32 %v758, 1.0
    %v825 = vadd.f32 %v760, 1.0
    %v826 = vadd.f32 %v762, 1.0
    %v827 = vadd.f32 %v764, 1.0
    %v828 = vadd.f32 %v766, 1.0
    %v829 = vadd.f32 %v768, 1.0
    %v830 = vadd.f32 %v770, 1.0
    %v831 = vadd.f32 %v772, 1.0
    %v832 = vadd.f32 %v774, 1.0
    %v833 = vadd.f32 %v776, 1.0
    %v834 = vadd.f32 %v778, 1.0
    %v835 = vadd.f32 %v780, 1.0
    %v836 = vadd.f32 %v782, 1.0
    %v837 = vadd.f32 %v784, 1.0
    %v838 = vadd.f32 %v786, 1.0
    %v839 = vadd.f32 %v788, 1.0
    %v840 = vadd.f32 %v790, 1.0
    %v841 = vadd.f32 %v792, 1.0
    %v842 = vadd.f32 %v794, 1.0
    %v843 = vrcp.pop %v795
    %v844 = vmul.f32 1.0, %v843
    %v845 = vrcp.pop %v796
    %v846 = vmul.f32 1.0, %v845
    %v847 = vrcp.pop %v797
    %v848 = vmul.f32 1.0, %v847
    %v849 = vrcp.pop %v798
    %v850 = vmul.f32 1.0, %v849
    %v851 = vrcp.pop %v799
    %v852 = vmul.f32 1.0, %v851
    %v853 = vrcp.pop %v800
    %v854 = vmul.f32 1.0, %v853
    %v855 = vrcp.pop %v801
    %v856 = vmul.f32 1.0, %v855
    %v857 = vrcp.pop %v802
    %v858 = vmul.f32 1.0, %v857
    %v859 = vrcp.pop %v803
    %v860 = vmul.f32 1.0, %v859
    %v861 = vrcp.pop %v804
    %v862 = vmul.f32 1.0, %v861
    %v863 = vrcp.pop %v805
    %v864 = vmul.f32 1.0, %v863
    %v865 = vrcp.pop %v806
    %v866 = vmul.f32 1.0, %v865
    %v867 = vrcp.pop %v807
    %v868 = vmul.f32 1.0, %v867
    %v869 = vrcp.pop %v808
    %v870 = vmul.f32 1.0, %v869
    %v871 = vrcp.pop %v809
    %v872 = vmul.f32 1.0, %v871
    %v873 = vrcp.pop %v810
    %v874 = vmul.f32 1.0, %v873
    %v875 = vrcp.pop %v811
    %v876 = vmul.f32 1.0, %v875
    %v877 = vrcp.pop %v812
    %v878 = vmul.f32 1.0, %v877
    %v879 = vrcp.pop %v813
    %v880 = vmul.f32 1.0, %v879
    %v881 = vrcp.pop %v814
    %v882 = vmul.f32 1.0, %v881
    %v883 = vrcp.pop %v815
    %v884 = vmul.f32 1.0, %v883
    %v885 = vrcp.pop %v816
    %v886 = vmul.f32 1.0, %v885
    %v887 = vrcp.pop %v817
    %v888 = vmul.f32 1.0, %v887
    %v889 = vrcp.pop %v818
    %v890 = vmul.f32 1.0, %v889
    %v891 = vrcp.pop %v819
    %v892 = vmul.f32 1.0, %v891
    %v893 = vrcp.pop %v820
    %v894 = vmul.f32 1.0, %v893
    %v895 = vrcp.pop %v821
    %v896 = vmul.f32 1.0, %v895
    %v897 = vrcp.pop %v822
    %v898 = vmul.f32 1.0, %v897
    %v899 = vrcp.pop %v823
    %v900 = vmul.f32 1.0, %v899
    %v901 = vrcp.pop %v824
    %v902 = vmul.f32 1.0, %v901
    %v903 = vrcp.pop %v825
    %v904 = vmul.f32 1.0, %v903
    %v905 = vrcp.pop %v826
    %v906 = vmul.f32 1.0, %v905
    %v907 = vrcp.pop %v827
    %v908 = vmul.f32 1.0, %v907
    %v909 = vrcp.pop %v828
    %v910 = vmul.f32 1.0, %v909
    %v911 = vrcp.pop %v829
    %v912 = vmul.f32 1.0, %v911
    %v913 = vrcp.pop %v830
    %v914 = vmul.f32 1.0, %v913
    %v915 = vrcp.pop %v831
    %v916 = vmul.f32 1.0, %v915
    %v917 = vrcp.pop %v832
    %v918 = vmul.f32 1.0, %v917
    %v919 = vrcp.pop %v833
    %v920 = vmul.f32 1.0, %v919
    %v921 = vrcp.pop %v834
    %v922 = vmul.f32 1.0, %v921
    %v923 = vrcp.pop %v835
    %v924 = vmul.f32 1.0, %v923
    %v925 = vrcp.pop %v836
    %v926 = vmul.f32 1.0, %v925
    %v927 = vrcp.pop %v837
    %v928 = vmul.f32 1.0, %v927
    %v929 = vrcp.pop %v838
    %v930 = vmul.f32 1.0, %v929
    %v931 = vrcp.pop %v839
    %v932 = vmul.f32 1.0, %v931
    %v933 = vrcp.pop %v840
    %v934 = vmul.f32 1.0, %v933
    %v935 = vrcp.pop %v841
    %v936 = vmul.f32 1.0, %v935
    %v937 = vrcp.pop %v842
    %v938 = vmul.f32 1.0, %v937
    %v939 = vmul.f32 %v235, %v844
    %v940 = vmul.f32 %v237, %v846
    %v941 = vmul.f32 %v396, %v848
    %v942 = vmul.f32 %v241, %v850
    %v943 = vmul.f32 %v243, %v852
    %v944 = vmul.f32 %v402, %v854
    %v945 = vmul.f32 %v247, %v856
    %v946 = vmul.f32 %v249, %v858
    %v947 = vmul.f32 %v408, %v860
    %v948 = vmul.f32 %v253, %v862
    %v949 = vmul.f32 %v255, %v864
    %v950 = vmul.f32 %v414, %v866
    %v951 = vmul.f32 %v259, %v868
    %v952 = vmul.f32 %v261, %v870
    %v953 = vmul.f32 %v420, %v872
    %v954 = vmul.f32 %v265, %v874
    %v955 = vmul.f32 %v267, %v876
    %v956 = vmul.f32 %v426, %v878
    %v957 = vmul.f32 %v271, %v880
    %v958 = vmul.f32 %v273, %v882
    %v959 = vmul.f32 %v432, %v884
    %v960 = vmul.f32 %v277, %v886
    %v961 = vmul.f32 %v279, %v888
    %v962 = vmul.f32 %v438, %v890
    %v963 = vmul.f32 %v283, %v892
    %v964 = vmul.f32 %v285, %v894
    %v965 = vmul.f32 %v444, %v896
    %v966 = vmul.f32 %v289, %v898
    %v967 = vmul.f32 %v291, %v900
    %v968 = vmul.f32 %v450, %v902
    %v969 = vmul.f32 %v295, %v904
    %v970 = vmul.f32 %v297, %v906
    %v971 = vmul.f32 %v456, %v908
    %v972 = vmul.f32 %v301, %v910
    %v973 = vmul.f32 %v303, %v912
    %v974 = vmul.f32 %v462, %v914
    %v975 = vmul.f32 %v307, %v916
    %v976 = vmul.f32 %v309, %v918
    %v977 = vmul.f32 %v468, %v920
    %v978 = vmul.f32 %v313, %v922
    %v979 = vmul.f32 %v315, %v924
    %v980 = vmul.f32 %v474, %v926
    %v981 = vmul.f32 %v319, %v928
    %v982 = vmul.f32 %v321, %v930
    %v983 = vmul.f32 %v480, %v932
    %v984 = vmul.f32 %v325, %v934
    %v985 = vmul.f32 %v327, %v936
    %v986 = vmul.f32 %v486, %v938
    %v987 = vmul.f32 %v939, %v398
    %v988 = vmul.f32 %v940, %v557
    %v989 = vmul.f32 %v941, %v559
    %v990 = vmul.f32 %v942, %v404
    %v991 = vmul.f32 %v943, %v563
    %v992 = vmul.f32 %v944, %v565
    %v993 = vmul.f32 %v945, %v410
    %v994 = vmul.f32 %v946, %v569
    %v995 = vmul.f32 %v947, %v571
    %v996 = vmul.f32 %v948, %v416
    %v997 = vmul.f32 %v949, %v575
    %v998 = vmul.f32 %v950, %v577
    %v999 = vmul.f32 %v951, %v422
    %v1000 = vmul.f32 %v952, %v581
    %v1001 = vmul.f32 %v953, %v583
    %v1002 = vmul.f32 %v954, %v428
    %v1003 = vmul.f32 %v955, %v587
    %v1004 = vmul.f32 %v956, %v589
    %v1005 = vmul.f32 %v957, %v434
    %v1006 = vmul.f32 %v958, %v593
    %v1007 = vmul.f32 %v959, %v595
    %v1008 = vmul.f32 %v960, %v440
    %v1009 = vmul.f32 %v961, %v599
    %v1010 = vmul.f32 %v962, %v601
    %v1011 = vmul.f32 %v963, %v446
    %v1012 = vmul.f32 %v964, %v605
    %v1013 = vmul.f32 %v965, %v607
    %v1014 = vmul.f32 %v966, %v452
    %v1015 = vmul.f32 %v967, %v611
    %v1016 = vmul.f32 %v968, %v613
    %v1017 = vmul.f32 %v969, %v458
    %v1018 = vmul.f32 %v970, %v617
    %v1019 = vmul.f32 %v971, %v619
    %v1020 = vmul.f32 %v972, %v464
    %v1021 = vmul.f32 %v973, %v623
    %v1022 = vmul.f32 %v974, %v625
    %v1023 = vmul.f32 %v975, %v470
    %v1024 = vmul.f32 %v976, %v629
    %v1025 = vmul.f32 %v977, %v631
    %v1026 = vmul.f32 %v978, %v476
    %v1027 = vmul.f32 %v979, %v635
    %v1028 = vmul.f32 %v980, %v637
    %v1029 = vmul.f32 %v981, %v482
    %v1030 = vmul.f32 %v982, %v641
    %v1031 = vmul.f32 %v983, %v643
    %v1032 = vmul.f32 %v984, %v488
    %v1033 = vmul.f32 %v985, %v647
    %v1034 = vmul.f32 %v986, %v649
    %v1035 = vld [vmem:[#allocation7] sm:$0xff]
    %v1036 = vld [vmem:[#allocation7 + $0x8] sm:$0xff]
    %v1037 = vld [vmem:[#allocation7 + $0x10] sm:$0xff]
    %v1038 = vld [vmem:[#allocation7 + $0x18] sm:$0xff]
    %v1039 = vld [vmem:[#allocation7 + $0x20] sm:$0xff]
    %v1040 = vld [vmem:[#allocation7 + $0x28] sm:$0xff]
    %v1041 = vld [vmem:[#allocation7 + $0x30] sm:$0xff]
    %v1042 = vld [vmem:[#allocation7 + $0x38] sm:$0xff]
    %v1043 = vld [vmem:[#allocation7 + $0x40] sm:$0xff]
    %v1044 = vld [vmem:[#allocation7 + $0x48] sm:$0xff]
    %v1045 = vld [vmem:[#allocation7 + $0x50] sm:$0xff]
    %v1046 = vld [vmem:[#allocation7 + $0x58] sm:$0xff]
    %v1047 = vld [vmem:[#allocation7 + $0x60] sm:$0xff]
    %v1048 = vld [vmem:[#allocation7 + $0x68] sm:$0xff]
    %v1049 = vld [vmem:[#allocation7 + $0x70] sm:$0xff]
    %v1050 = vld [vmem:[#allocation7 + $0x78] sm:$0xff]
    %v1051 = vld [vmem:[#allocation7 + $0x80] sm:$0xff]
    %v1052 = vld [vmem:[#allocation7 + $0x88] sm:$0xff]
    %v1053 = vld [vmem:[#allocation7 + $0x90] sm:$0xff]
    %v1054 = vld [vmem:[#allocation7 + $0x98] sm:$0xff]
    %v1055 = vld [vmem:[#allocation7 + $0xa0] sm:$0xff]
    %v1056 = vld [vmem:[#allocation7 + $0xa8] sm:$0xff]
    %v1057 = vld [vmem:[#allocation7 + $0xb0] sm:$0xff]
    %v1058 = vld [vmem:[#allocation7 + $0xb8] sm:$0xff]
    %v1059 = vld [vmem:[#allocation7 + $0xc0] sm:$0xff]
    %v1060 = vld [vmem:[#allocation7 + $0xc8] sm:$0xff]
    %v1061 = vld [vmem:[#allocation7 + $0xd0] sm:$0xff]
    %v1062 = vld [vmem:[#allocation7 + $0xd8] sm:$0xff]
    %v1063 = vld [vmem:[#allocation7 + $0xe0] sm:$0xff]
    %v1064 = vld [vmem:[#allocation7 + $0xe8] sm:$0xff]
    %v1065 = vld [vmem:[#allocation7 + $0xf0] sm:$0xff]
    %v1066 = vld [vmem:[#allocation7 + $0xf8] sm:$0xff]
    %v1067 = vld [vmem:[#allocation7 + $0x100] sm:$0xff]
    %v1068 = vld [vmem:[#allocation7 + $0x108] sm:$0xff]
    %v1069 = vld [vmem:[#allocation7 + $0x110] sm:$0xff]
    %v1070 = vld [vmem:[#allocation7 + $0x118] sm:$0xff]
    %v1071 = vld [vmem:[#allocation7 + $0x120] sm:$0xff]
    %v1072 = vld [vmem:[#allocation7 + $0x128] sm:$0xff]
    %v1073 = vld [vmem:[#allocation7 + $0x130] sm:$0xff]
    %v1074 = vld [vmem:[#allocation7 + $0x138] sm:$0xff]
    %v1075 = vld [vmem:[#allocation7 + $0x140] sm:$0xff]
    %v1076 = vld [vmem:[#allocation7 + $0x148] sm:$0xff]
    %v1077 = vld [vmem:[#allocation7 + $0x150] sm:$0xff]
    %v1078 = vld [vmem:[#allocation7 + $0x158] sm:$0xff]
    %v1079 = vld [vmem:[#allocation7 + $0x160] sm:$0xff]
    %v1080 = vld [vmem:[#allocation7 + $0x168] sm:$0xff]
    %v1081 = vld [vmem:[#allocation7 + $0x170] sm:$0xff]
    %v1082 = vld [vmem:[#allocation7 + $0x178] sm:$0xff]
    %1083 = vmatprep.subr.mxu0 0.0
    %1084 = vmatpush1.msra.mxu0 %v1050
    %1085 = vmatprep.subr.mxu0 0.0
    %1086 = vmatpush1.msra.mxu0 %v1049
    %1087 = vmatprep.subr.mxu0 0.0
    %1088 = vmatpush1.msra.mxu0 %v1048
    %1089 = vmatprep.subr.mxu0 0.0
    %1090 = vmatpush1.msra.mxu0 %v1047
    %1091 = vmatprep.subr.mxu0 0.0
    %1092 = vmatpush1.msra.mxu0 %v1046
    %1093 = vmatprep.subr.mxu0 0.0
    %1094 = vmatpush1.msra.mxu0 %v1045
    %1095 = vmatprep.subr.mxu0 0.0
    %1096 = vmatpush1.msra.mxu0 %v1044
    %1097 = vmatprep.subr.mxu0 0.0
    %1098 = vmatpush1.msra.mxu0 %v1043
    %1099 = vmatprep.subr.mxu0 0.0
    %1100 = vmatpush1.msra.mxu0 %v1042
    %1101 = vmatprep.subr.mxu0 0.0
    %1102 = vmatpush1.msra.mxu0 %v1041
    %1103 = vmatprep.subr.mxu0 0.0
    %1104 = vmatpush1.msra.mxu0 %v1040
    %1105 = vmatprep.subr.mxu0 0.0
    %1106 = vmatpush1.msra.mxu0 %v1039
    %1107 = vmatprep.subr.mxu0 0.0
    %1108 = vmatpush1.msra.mxu0 %v1038
    %1109 = vmatprep.subr.mxu0 0.0
    %1110 = vmatpush1.msra.mxu0 %v1037
    %1111 = vmatprep.subr.mxu0 0.0
    %1112 = vmatpush1.msra.mxu0 %v1036
    %1113 = vmatprep.subr.mxu0 0.0
    %1114 = vmatpush1.msra.mxu0 %v1035
    %1115 = vmatprep.subr.mxu0 0.0
    %1116 = vmatpush2.msra.mxu0 %v1066
    %1117 = vmatprep.subr.mxu0 0.0
    %1118 = vmatpush2.msra.mxu0 %v1065
    %1119 = vmatprep.subr.mxu0 0.0
    %1120 = vmatpush2.msra.mxu0 %v1064
    %1121 = vmatprep.subr.mxu0 0.0
    %1122 = vmatpush2.msra.mxu0 %v1063
    %1123 = vmatprep.subr.mxu0 0.0
    %1124 = vmatpush2.msra.mxu0 %v1062
    %1125 = vmatprep.subr.mxu0 0.0
    %1126 = vmatpush2.msra.mxu0 %v1061
    %1127 = vmatprep.subr.mxu0 0.0
    %1128 = vmatpush2.msra.mxu0 %v1060
    %1129 = vmatprep.subr.mxu0 0.0
    %1130 = vmatpush2.msra.mxu0 %v1059
    %1131 = vmatprep.subr.mxu0 0.0
    %1132 = vmatpush2.msra.mxu0 %v1058
    %1133 = vmatprep.subr.mxu0 0.0
    %1134 = vmatpush2.msra.mxu0 %v1057
    %1135 = vmatprep.subr.mxu0 0.0
    %1136 = vmatpush2.msra.mxu0 %v1056
    %1137 = vmatprep.subr.mxu0 0.0
    %1138 = vmatpush2.msra.mxu0 %v1055
    %1139 = vmatprep.subr.mxu0 0.0
    %1140 = vmatpush2.msra.mxu0 %v1054
    %1141 = vmatprep.subr.mxu0 0.0
    %1142 = vmatpush2.msra.mxu0 %v1053
    %1143 = vmatprep.subr.mxu0 0.0
    %1144 = vmatpush2.msra.mxu0 %v1052
    %1145 = vmatprep.subr.mxu0 0.0
    %1146 = vmatpush2.msra.mxu0 %v1051
    %1147 = vmatprep.mubr.f32.mxu0 %v988
    %1148 = vmatmul.mubr.f32.gmra.mxu0 %v987
    %v1149 = vpop.f32.mrf.mxu0
    %v1150 = vadd.f32 0.0, %v1149
    %v1151 = vpop.f32.mrf.mxu0
    %1152 = vmatprep.mubr.f32.mxu0 %v991
    %1153 = vmatmul.mubr.f32.gmra.mxu0 %v990
    %v1154 = vpop.f32.mrf.mxu0
    %v1155 = vadd.f32 0.0, %v1154
    %v1156 = vpop.f32.mrf.mxu0
    %1157 = vmatprep.mubr.f32.mxu0 %v994
    %1158 = vmatmul.mubr.f32.gmra.mxu0 %v993
    %v1159 = vpop.f32.mrf.mxu0
    %v1160 = vadd.f32 0.0, %v1159
    %v1161 = vpop.f32.mrf.mxu0
    %1162 = vmatprep.mubr.f32.mxu0 %v997
    %1163 = vmatmul.mubr.f32.gmra.mxu0 %v996
    %v1164 = vpop.f32.mrf.mxu0
    %v1165 = vadd.f32 0.0, %v1164
    %v1166 = vpop.f32.mrf.mxu0
    %1167 = vmatprep.mubr.f32.mxu0 %v1000
    %1168 = vmatmul.mubr.f32.gmra.mxu0 %v999
    %v1169 = vpop.f32.mrf.mxu0
    %v1170 = vadd.f32 0.0, %v1169
    %v1171 = vpop.f32.mrf.mxu0
    %1172 = vmatprep.mubr.f32.mxu0 %v1003
    %1173 = vmatmul.mubr.f32.gmra.mxu0 %v1002
    %v1174 = vpop.f32.mrf.mxu0
    %v1175 = vadd.f32 0.0, %v1174
    %v1176 = vpop.f32.mrf.mxu0
    %1177 = vmatprep.mubr.f32.mxu0 %v1006
    %1178 = vmatmul.mubr.f32.gmra.mxu0 %v1005
    %v1179 = vpop.f32.mrf.mxu0
    %v1180 = vadd.f32 0.0, %v1179
    %v1181 = vpop.f32.mrf.mxu0
    %1182 = vmatprep.mubr.f32.mxu0 %v1009
    %1183 = vmatmul.mubr.f32.gmra.mxu0 %v1008
    %v1184 = vpop.f32.mrf.mxu0
    %v1185 = vadd.f32 0.0, %v1184
    %v1186 = vpop.f32.mrf.mxu0
    %1187 = vmatprep.mubr.f32.mxu0 %v1012
    %1188 = vmatmul.mubr.f32.gmra.mxu0 %v1011
    %v1189 = vpop.f32.mrf.mxu0
    %v1190 = vadd.f32 0.0, %v1189
    %v1191 = vpop.f32.mrf.mxu0
    %1192 = vmatprep.mubr.f32.mxu0 %v1015
    %1193 = vmatmul.mubr.f32.gmra.mxu0 %v1014
    %v1194 = vpop.f32.mrf.mxu0
    %v1195 = vadd.f32 0.0, %v1194
    %v1196 = vpop.f32.mrf.mxu0
    %1197 = vmatprep.mubr.f32.mxu0 %v1018
    %1198 = vmatmul.mubr.f32.gmra.mxu0 %v1017
    %v1199 = vpop.f32.mrf.mxu0
    %v1200 = vadd.f32 0.0, %v1199
    %v1201 = vpop.f32.mrf.mxu0
    %1202 = vmatprep.mubr.f32.mxu0 %v1021
    %1203 = vmatmul.mubr.f32.gmra.mxu0 %v1020
    %v1204 = vpop.f32.mrf.mxu0
    %v1205 = vadd.f32 0.0, %v1204
    %v1206 = vpop.f32.mrf.mxu0
    %1207 = vmatprep.mubr.f32.mxu0 %v1024
    %1208 = vmatmul.mubr.f32.gmra.mxu0 %v1023
    %v1209 = vpop.f32.mrf.mxu0
    %v1210 = vadd.f32 0.0, %v1209
    %v1211 = vpop.f32.mrf.mxu0
    %1212 = vmatprep.mubr.f32.mxu0 %v1027
    %1213 = vmatmul.mubr.f32.gmra.mxu0 %v1026
    %v1214 = vpop.f32.mrf.mxu0
    %v1215 = vadd.f32 0.0, %v1214
    %v1216 = vpop.f32.mrf.mxu0
    %1217 = vmatprep.mubr.f32.mxu0 %v1030
    %1218 = vmatmul.mubr.f32.gmra.mxu0 %v1029
    %v1219 = vpop.f32.mrf.mxu0
    %v1220 = vadd.f32 0.0, %v1219
    %v1221 = vpop.f32.mrf.mxu0
    %1222 = vmatprep.mubr.f32.mxu0 %v1033
    %1223 = vmatmul.mubr.f32.gmra.mxu0 %v1032
    %v1224 = vpop.f32.mrf.mxu0
    %v1225 = vadd.f32 0.0, %v1224
    %v1226 = vpop.f32.mrf.mxu0
    %1227 = vdwg.mxu0
    %1228 = vmatprep.subr.mxu0 0.0
    %1229 = vmatpush1.msra.mxu0 %v1082
    %1230 = vmatprep.subr.mxu0 0.0
    %1231 = vmatpush1.msra.mxu0 %v1081
    %1232 = vmatprep.subr.mxu0 0.0
    %1233 = vmatpush1.msra.mxu0 %v1080
    %1234 = vmatprep.subr.mxu0 0.0
    %1235 = vmatpush1.msra.mxu0 %v1079
    %1236 = vmatprep.subr.mxu0 0.0
    %1237 = vmatpush1.msra.mxu0 %v1078
    %1238 = vmatprep.subr.mxu0 0.0
    %1239 = vmatpush1.msra.mxu0 %v1077
    %1240 = vmatprep.subr.mxu0 0.0
    %1241 = vmatpush1.msra.mxu0 %v1076
    %1242 = vmatprep.subr.mxu0 0.0
    %1243 = vmatpush1.msra.mxu0 %v1075
    %1244 = vmatprep.subr.mxu0 0.0
    %1245 = vmatpush1.msra.mxu0 %v1074
    %1246 = vmatprep.subr.mxu0 0.0
    %1247 = vmatpush1.msra.mxu0 %v1073
    %1248 = vmatprep.subr.mxu0 0.0
    %1249 = vmatpush1.msra.mxu0 %v1072
    %1250 = vmatprep.subr.mxu0 0.0
    %1251 = vmatpush1.msra.mxu0 %v1071
    %1252 = vmatprep.subr.mxu0 0.0
    %1253 = vmatpush1.msra.mxu0 %v1070
    %1254 = vmatprep.subr.mxu0 0.0
    %1255 = vmatpush1.msra.mxu0 %v1069
    %1256 = vmatprep.subr.mxu0 0.0
    %1257 = vmatpush1.msra.mxu0 %v1068
    %1258 = vmatprep.subr.mxu0 0.0
    %1259 = vmatpush1.msra.mxu0 %v1067
    %1260 = vmatprep.subr.mxu0 0.0
    %1261 = vmatpush2.msra.mxu0 0.0
    %1262 = vmatprep.subr.mxu0 0.0
    %1263 = vmatpush2.msra.mxu0 0.0
    %1264 = vmatprep.subr.mxu0 0.0
    %1265 = vmatpush2.msra.mxu0 0.0
    %1266 = vmatprep.subr.mxu0 0.0
    %1267 = vmatpush2.msra.mxu0 0.0
    %1268 = vmatprep.subr.mxu0 0.0
    %1269 = vmatpush2.msra.mxu0 0.0
    %1270 = vmatprep.subr.mxu0 0.0
    %1271 = vmatpush2.msra.mxu0 0.0
    %1272 = vmatprep.subr.mxu0 0.0
    %1273 = vmatpush2.msra.mxu0 0.0
    %1274 = vmatprep.subr.mxu0 0.0
    %1275 = vmatpush2.msra.mxu0 0.0
    %1276 = vmatprep.subr.mxu0 0.0
    %1277 = vmatpush2.msra.mxu0 0.0
    %1278 = vmatprep.subr.mxu0 0.0
    %1279 = vmatpush2.msra.mxu0 0.0
    %1280 = vmatprep.subr.mxu0 0.0
    %1281 = vmatpush2.msra.mxu0 0.0
    %1282 = vmatprep.subr.mxu0 0.0
    %1283 = vmatpush2.msra.mxu0 0.0
    %1284 = vmatprep.subr.mxu0 0.0
    %1285 = vmatpush2.msra.mxu0 0.0
    %1286 = vmatprep.subr.mxu0 0.0
    %1287 = vmatpush2.msra.mxu0 0.0
    %1288 = vmatprep.subr.mxu0 0.0
    %1289 = vmatpush2.msra.mxu0 0.0
    %1290 = vmatprep.subr.mxu0 0.0
    %1291 = vmatpush2.msra.mxu0 0.0
    %1292 = vmatprep.mubr.f32.mxu0 0.0
    %1293 = vmatmul.mubr.f32.gmra.mxu0 %v989
    %v1294 = vpop.f32.mrf.mxu0
    %v1295 = vadd.f32 %v1150, %v1294
    %v1296 = vpop.f32.mrf.mxu0
    %1297 = vmatprep.mubr.f32.mxu0 0.0
    %1298 = vmatmul.mubr.f32.gmra.mxu0 %v992
    %v1299 = vpop.f32.mrf.mxu0
    %v1300 = vadd.f32 %v1155, %v1299
    %v1301 = vpop.f32.mrf.mxu0
    %1302 = vmatprep.mubr.f32.mxu0 0.0
    %1303 = vmatmul.mubr.f32.gmra.mxu0 %v995
    %v1304 = vpop.f32.mrf.mxu0
    %v1305 = vadd.f32 %v1160, %v1304
    %v1306 = vpop.f32.mrf.mxu0
    %1307 = vmatprep.mubr.f32.mxu0 0.0
    %1308 = vmatmul.mubr.f32.gmra.mxu0 %v998
    %v1309 = vpop.f32.mrf.mxu0
    %v1310 = vadd.f32 %v1165, %v1309
    %v1311 = vpop.f32.mrf.mxu0
    %1312 = vmatprep.mubr.f32.mxu0 0.0
    %1313 = vmatmul.mubr.f32.gmra.mxu0 %v1001
    %v1314 = vpop.f32.mrf.mxu0
    %v1315 = vadd.f32 %v1170, %v1314
    %v1316 = vpop.f32.mrf.mxu0
    %1317 = vmatprep.mubr.f32.mxu0 0.0
    %1318 = vmatmul.mubr.f32.gmra.mxu0 %v1004
    %v1319 = vpop.f32.mrf.mxu0
    %v1320 = vadd.f32 %v1175, %v1319
    %v1321 = vpop.f32.mrf.mxu0
    %1322 = vmatprep.mubr.f32.mxu0 0.0
    %1323 = vmatmul.mubr.f32.gmra.mxu0 %v1007
    %v1324 = vpop.f32.mrf.mxu0
    %v1325 = vadd.f32 %v1180, %v1324
    %v1326 = vpop.f32.mrf.mxu0
    %1327 = vmatprep.mubr.f32.mxu0 0.0
    %1328 = vmatmul.mubr.f32.gmra.mxu0 %v1010
    %v1329 = vpop.f32.mrf.mxu0
    %v1330 = vadd.f32 %v1185, %v1329
    %v1331 = vpop.f32.mrf.mxu0
    %1332 = vmatprep.mubr.f32.mxu0 0.0
    %1333 = vmatmul.mubr.f32.gmra.mxu0 %v1013
    %v1334 = vpop.f32.mrf.mxu0
    %v1335 = vadd.f32 %v1190, %v1334
    %v1336 = vpop.f32.mrf.mxu0
    %1337 = vmatprep.mubr.f32.mxu0 0.0
    %1338 = vmatmul.mubr.f32.gmra.mxu0 %v1016
    %v1339 = vpop.f32.mrf.mxu0
    %v1340 = vadd.f32 %v1195, %v1339
    %v1341 = vpop.f32.mrf.mxu0
    %1342 = vmatprep.mubr.f32.mxu0 0.0
    %1343 = vmatmul.mubr.f32.gmra.mxu0 %v1019
    %v1344 = vpop.f32.mrf.mxu0
    %v1345 = vadd.f32 %v1200, %v1344
    %v1346 = vpop.f32.mrf.mxu0
    %1347 = vmatprep.mubr.f32.mxu0 0.0
    %1348 = vmatmul.mubr.f32.gmra.mxu0 %v1022
    %v1349 = vpop.f32.mrf.mxu0
    %v1350 = vadd.f32 %v1205, %v1349
    %v1351 = vpop.f32.mrf.mxu0
    %1352 = vmatprep.mubr.f32.mxu0 0.0
    %1353 = vmatmul.mubr.f32.gmra.mxu0 %v1025
    %v1354 = vpop.f32.mrf.mxu0
    %v1355 = vadd.f32 %v1210, %v1354
    %v1356 = vpop.f32.mrf.mxu0
    %1357 = vmatprep.mubr.f32.mxu0 0.0
    %1358 = vmatmul.mubr.f32.gmra.mxu0 %v1028
    %v1359 = vpop.f32.mrf.mxu0
    %v1360 = vadd.f32 %v1215, %v1359
    %v1361 = vpop.f32.mrf.mxu0
    %1362 = vmatprep.mubr.f32.mxu0 0.0
    %1363 = vmatmul.mubr.f32.gmra.mxu0 %v1031
    %v1364 = vpop.f32.mrf.mxu0
    %v1365 = vadd.f32 %v1220, %v1364
    %v1366 = vpop.f32.mrf.mxu0
    %1367 = vmatprep.mubr.f32.mxu0 0.0
    %1368 = vmatmul.mubr.f32.gmra.mxu0 %v1034
    %v1369 = vpop.f32.mrf.mxu0
    %v1370 = vadd.f32 %v1225, %v1369
    %v1371 = vpop.f32.mrf.mxu0
    %1372 = vdwg.mxu0
    %p1373 = scmp.eq.s32.totalorder 0, 0
    // Predicated region
    $region26: #{tpu_custom_call.1} parent=1 // pred_check
      %p1374 = pneg %p1373
    $region27: #{tpu_custom_call.1} parent=1 // pred_check_branch
      %1376 = sbr.rel (%p1374) target = $region29
    $region28: #{tpu_custom_call.1} parent=1 // pred_region
      %1377 = vst [vmem:[#allocation8] sm:$0xff] %v1295
      %1378 = vst [vmem:[#allocation8 + $0x8] sm:$0xff] %v1300
      %1379 = vst [vmem:[#allocation8 + $0x10] sm:$0xff] %v1305
      %1380 = vst [vmem:[#allocation8 + $0x18] sm:$0xff] %v1310
      %1381 = vst [vmem:[#allocation8 + $0x20] sm:$0xff] %v1315
      %1382 = vst [vmem:[#allocation8 + $0x28] sm:$0xff] %v1320
      %1383 = vst [vmem:[#allocation8 + $0x30] sm:$0xff] %v1325
      %1384 = vst [vmem:[#allocation8 + $0x38] sm:$0xff] %v1330
      %1385 = vst [vmem:[#allocation8 + $0x40] sm:$0xff] %v1335
      %1386 = vst [vmem:[#allocation8 + $0x48] sm:$0xff] %v1340
      %1387 = vst [vmem:[#allocation8 + $0x50] sm:$0xff] %v1345
      %1388 = vst [vmem:[#allocation8 + $0x58] sm:$0xff] %v1350
      %1389 = vst [vmem:[#allocation8 + $0x60] sm:$0xff] %v1355
      %1390 = vst [vmem:[#allocation8 + $0x68] sm:$0xff] %v1360
      %1391 = vst [vmem:[#allocation8 + $0x70] sm:$0xff] %v1365
      %1392 = vst [vmem:[#allocation8 + $0x78] sm:$0xff] %v1370
    $region29: #{tpu_custom_call.1} parent=1 // pred_fallthru
      _
    %p1393 = scmp.gt.s32.totalorder 0, 0
    // Predicated region
    $region30: #{tpu_custom_call.1} parent=1 // pred_check
      %p1394 = pneg %p1393
    $region31: #{tpu_custom_call.1} parent=1 // pred_check_branch
      %1396 = sbr.rel (%p1394) target = $region33
    $region32: #{tpu_custom_call.1} parent=1 // pred_region
      %v1397 = vld [vmem:[#allocation8] sm:$0xff]
      %v1398 = vld [vmem:[#allocation8 + $0x8] sm:$0xff]
      %v1399 = vld [vmem:[#allocation8 + $0x10] sm:$0xff]
      %v1400 = vld [vmem:[#allocation8 + $0x18] sm:$0xff]
      %v1401 = vld [vmem:[#allocation8 + $0x20] sm:$0xff]
      %v1402 = vld [vmem:[#allocation8 + $0x28] sm:$0xff]
      %v1403 = vld [vmem:[#allocation8 + $0x30] sm:$0xff]
      %v1404 = vld [vmem:[#allocation8 + $0x38] sm:$0xff]
      %v1405 = vld [vmem:[#allocation8 + $0x40] sm:$0xff]
      %v1406 = vld [vmem:[#allocation8 + $0x48] sm:$0xff]
      %v1407 = vld [vmem:[#allocation8 + $0x50] sm:$0xff]
      %v1408 = vld [vmem:[#allocation8 + $0x58] sm:$0xff]
      %v1409 = vld [vmem:[#allocation8 + $0x60] sm:$0xff]
      %v1410 = vld [vmem:[#allocation8 + $0x68] sm:$0xff]
      %v1411 = vld [vmem:[#allocation8 + $0x70] sm:$0xff]
      %v1412 = vld [vmem:[#allocation8 + $0x78] sm:$0xff]
      %v1413 = vadd.f32 %v1397, %v1295
      %v1414 = vadd.f32 %v1398, %v1300
      %v1415 = vadd.f32 %v1399, %v1305
      %v1416 = vadd.f32 %v1400, %v1310
      %v1417 = vadd.f32 %v1401, %v1315
      %v1418 = vadd.f32 %v1402, %v1320
      %v1419 = vadd.f32 %v1403, %v1325
      %v1420 = vadd.f32 %v1404, %v1330
      %v1421 = vadd.f32 %v1405, %v1335
      %v1422 = vadd.f32 %v1406, %v1340
      %v1423 = vadd.f32 %v1407, %v1345
      %v1424 = vadd.f32 %v1408, %v1350
      %v1425 = vadd.f32 %v1409, %v1355
      %v1426 = vadd.f32 %v1410, %v1360
      %v1427 = vadd.f32 %v1411, %v1365
      %v1428 = vadd.f32 %v1412, %v1370
      %1429 = vst [vmem:[#allocation8] sm:$0xff] %v1413
      %1430 = vst [vmem:[#allocation8 + $0x8] sm:$0xff] %v1414
      %1431 = vst [vmem:[#allocation8 + $0x10] sm:$0xff] %v1415
      %1432 = vst [vmem:[#allocation8 + $0x18] sm:$0xff] %v1416
      %1433 = vst [vmem:[#allocation8 + $0x20] sm:$0xff] %v1417
      %1434 = vst [vmem:[#allocation8 + $0x28] sm:$0xff] %v1418
      %1435 = vst [vmem:[#allocation8 + $0x30] sm:$0xff] %v1419
      %1436 = vst [vmem:[#allocation8 + $0x38] sm:$0xff] %v1420
      %1437 = vst [vmem:[#allocation8 + $0x40] sm:$0xff] %v1421
      %1438 = vst [vmem:[#allocation8 + $0x48] sm:$0xff] %v1422
      %1439 = vst [vmem:[#allocation8 + $0x50] sm:$0xff] %v1423
      %1440 = vst [vmem:[#allocation8 + $0x58] sm:$0xff] %v1424
      %1441 = vst [vmem:[#allocation8 + $0x60] sm:$0xff] %v1425
      %1442 = vst [vmem:[#allocation8 + $0x68] sm:$0xff] %v1426
      %1443 = vst [vmem:[#allocation8 + $0x70] sm:$0xff] %v1427
      %1444 = vst [vmem:[#allocation8 + $0x78] sm:$0xff] %v1428
    $region33: #{tpu_custom_call.1} parent=1 // pred_fallthru
      _
    // Predicated region
    $region34: #{tpu_custom_call.1} parent=1 // pred_check
      _
    $region35: #{tpu_custom_call.1} parent=1 // pred_check_branch
      %1446 = sbr.rel (0) target = $region37
    $region36: #{tpu_custom_call.1} parent=1 // pred_region
      %s1448 = ssub.s32 2048, 2048
      %1449 = vsyncadd [#allocation4], %s1448
      %s1450 = sshll.u32 [#allocation8], 4
      %s1451 = int_to_ptr.vmem [resolvable:$true] %s1450
      %1456 = dma.vmem_to_hbm [thread:$0]  %s1451, 2048, %s3, [#allocation4], 128, 128, 8
    $region37: #{tpu_custom_call.1} parent=1 // pred_fallthru
      _
    // Predicated region
    $region38: #{tpu_custom_call.1} parent=1 // pred_check
      _
    $region39: #{tpu_custom_call.1} parent=1 // pred_check_branch
      %1458 = sbr.rel (0) target = $region41
    $region40: #{tpu_custom_call.1} parent=1 // pred_region
      %1459 = dma.done [#allocation4], 2048
    $region41: #{tpu_custom_call.1} parent=1 // pred_fallthru
      _
    %1460 = vsyncpa [#allocation3], 1
    %1461 = vsyncpa [#allocation6], 1
    %1462 = vsyncpa [#allocation4], 1

</llo_original>
